<compile_context>
chip_gen: v7x
topology: tpu7x:2x2x1
jax: 0.10.0
libtpu: 0.0.40
codegen_flags: <defaults>
</compile_context>

<pallas_src>
import numpy as np
import jax
import jax.numpy as jnp
from jax import lax
from jax.experimental import pallas as pl
from jax.experimental.pallas import tpu as pltpu

_LANE = 128
_SUBLANE = 8
# Per-tile VMEM model used to derive tile_rows: double-buffered native-dtype
# inputs + (generous) allowance for f32 temporaries.  ~2048 rows for f32, Q=3.
_TILE_VMEM_BUDGET = 32 << 20


def _make_quantile_kernel(quantiles, tile_rows, rows, mm_bf16):
    Q = len(quantiles)
    LQ = _LANE * Q
    needs_row_mask = (rows % tile_rows) != 0          # static
    mm_dtype = jnp.bfloat16 if mm_bf16 else jnp.float32

    def kernel(preds_ref, target_ref, out_ref):
        # ---- compile-time patterns built from iota (no HBM constant inputs) ----
        # expand[j, k] = 1.0 iff k // Q == j  <=>  0 <= k - j*Q < Q
        # (affine + compares only; avoids vector integer div).
        row = lax.broadcasted_iota(jnp.int32, (_LANE, LQ), 0)
        col = lax.broadcasted_iota(jnp.int32, (_LANE, LQ), 1)
        d = col - row * Q
        expand = jnp.where(jnp.logical_and(d >= 0, d < Q), 1.0, 0.0).astype(mm_dtype)

        # Per-lane quantile value: lane k -> quantiles[k % Q].
        # k % Q computed with exact small-integer float math (no vector mod).
        k = lax.broadcasted_iota(jnp.int32, (1, LQ), 1).astype(jnp.float32)
        grp = jnp.floor((k + 0.5) * (1.0 / Q))        # == k // Q (robust)
        rem = k - jnp.float32(Q) * grp                # == k % Q (exact)
        qvec = jnp.zeros((1, LQ), jnp.float32)
        for i, q in enumerate(quantiles):
            qvec = jnp.where(rem == jnp.float32(i), jnp.float32(q), qvec)

        # ---- broadcast target across its Q interleaved lanes on the MXU ----
        if mm_bf16:
            # bf16 target x exact 0/1 bf16 expand, f32 accumulation: one MXU
            # pass, bit-exact w.r.t. the stored bf16 target.
            t_rep = jnp.dot(target_ref[...], expand,
                            preferred_element_type=jnp.float32)
        else:
            # f32 path: HIGHEST forces the multi-pass f32 matmul; with an
            # exactly-representable 0/1 RHS the copy is bit-exact.
            t_rep = jnp.dot(target_ref[...].astype(jnp.float32), expand,
                            precision=lax.Precision.HIGHEST,
                            preferred_element_type=jnp.float32)

        p = preds_ref[...].astype(jnp.float32)
        err = t_rep - p
        # pinball loss: max((q - 1)*e, q*e) == q*e - min(e, 0)
        loss = qvec * err - jnp.minimum(err, 0.0)

        if needs_row_mask:
            # Last grid tile extends past the (rows, LQ) array; the boundary
            # DMA leaves those rows undefined -> zero them before reducing.
            r_in_tile = lax.broadcasted_iota(jnp.int32, (tile_rows, LQ), 0)
            limit = rows - pl.program_id(0) * tile_rows
            loss = jnp.where(r_in_tile < limit, loss, 0.0)

        # Reduce to a full (8, LQ) tile: tile-aligned reshape + leading-axis
        # sum (pure vreg adds, no XLU), then an unmasked (8,128)-aligned store.
        acc = jnp.sum(loss.reshape(tile_rows // _SUBLANE, _SUBLANE, LQ), axis=0)
        out_ref[0] = acc

    return kernel


def quantile_loss(preds, target, quantiles, tile_rows=None):
    """Pallas implementation of QuantileLoss.forward.

    preds:  float array (..., Q)
    target: float array (...)   (same leading shape as preds)
    quantiles: python list/tuple of Q floats
    Returns a scalar float32.
    """
    quantiles = tuple(float(q) for q in quantiles)
    Q = preds.shape[-1]
    assert Q == len(quantiles)
    assert preds.shape[:-1] == target.shape

    N = int(np.prod(preds.shape[:-1]))
    assert N > 0
    LQ = _LANE * Q

    p_bytes = jnp.dtype(preds.dtype).itemsize
    t_bytes = jnp.dtype(target.dtype).itemsize
    mm_bf16 = target.dtype == jnp.bfloat16

    preds2 = preds.reshape(N, Q)          # native dtype, no up-cast here
    target2 = target.reshape(N)

    # Lane alignment: the free row-major view (N, Q) -> (N/128, 128*Q) needs
    # N % 128 == 0 (and at least 8 rows).  Zero-pad ONLY in that case; zero
    # rows contribute exactly 0 loss and the divisor stays N*Q.  128-aligned
    # inputs (rows >= 8) incur no host-side copy — the ragged tile boundary is
    # handled in-kernel instead of padding up to a tile multiple.
    n_pad = max(-(-N // _LANE) * _LANE, _SUBLANE * _LANE)
    if n_pad != N:
        preds2 = jnp.pad(preds2, ((0, n_pad - N), (0, 0)))
        target2 = jnp.pad(target2, ((0, n_pad - N),))
    rows = n_pad // _LANE

    preds_r = preds2.reshape(rows, LQ)        # free (row-major) reshape
    target_r = target2.reshape(rows, _LANE)   # free (row-major) reshape

    # ---- tile-size derivation: dtype- and VMEM-budget-aware ----
    if tile_rows is None:
        per_row = (2 * _LANE * (Q * p_bytes + t_bytes)   # double-buffered inputs
                   + 8 * Q * _LANE * 4)                  # f32 temporaries (generous)
        tile_rows = _TILE_VMEM_BUDGET // per_row
    tile_rows = max(_SUBLANE, (int(tile_rows) // _SUBLANE) * _SUBLANE)
    rows8 = -(-rows // _SUBLANE) * _SUBLANE
    tile_rows = min(tile_rows, rows8)
    if rows8 > _SUBLANE:
        # Guarantee >= 2 grid steps so both v7x TensorCores are used
        # ("parallel" grid); negligible overhead on single-TC v5e/v6e.
        half = -(-(-(-rows // 2)) // _SUBLANE) * _SUBLANE
        tile_rows = min(tile_rows, max(_SUBLANE, half))
    num_tiles = -(-rows // tile_rows)

    kernel = _make_quantile_kernel(quantiles, tile_rows, rows, mm_bf16)

    # Explicit scoped-VMEM limit: covers double-buffered inputs + f32
    # temporaries; 40 MiB default keeps headroom under v7x's 64 MiB physical
    # VMEM and lifts v5e's 16 MiB default.
    est_vmem = (2 * tile_rows * _LANE * (Q * p_bytes + t_bytes)
                + 8 * tile_rows * LQ * 4
                + (4 << 20))
    vmem_limit = int(min(max(est_vmem, 40 << 20), 96 << 20))

    cost = pl.CostEstimate(
        flops=int(5 * N * Q + 2 * rows * _LANE * LQ),
        transcendentals=0,
        bytes_accessed=int(rows * _LANE * (Q * p_bytes + t_bytes)
                           + num_tiles * _SUBLANE * LQ * 4),
    )

    partials = pl.pallas_call(
        kernel,
        out_shape=jax.ShapeDtypeStruct((num_tiles, _SUBLANE, LQ), jnp.float32),
        grid=(num_tiles,),
        in_specs=[
            pl.BlockSpec((tile_rows, LQ), lambda i: (i, 0)),      # preds (lane-dense)
            pl.BlockSpec((tile_rows, _LANE), lambda i: (i, 0)),   # target
        ],
        out_specs=pl.BlockSpec((1, _SUBLANE, LQ), lambda i: (i, 0, 0)),
        compiler_params=pltpu.CompilerParams(
            dimension_semantics=("parallel",),   # independent tiles -> megacore
            vmem_limit_bytes=vmem_limit),
        cost_estimate=cost,
    )(preds_r, target_r)

    # Tiny final reduction + normalization outside the kernel (f32).
    return jnp.sum(partials) / jnp.float32(N * Q)


def quantile_loss_ref(preds, target, quantiles):
    """Pure-JAX reference mirroring the PyTorch module exactly."""
    p = preds.astype(jnp.float32)
    t = target.astype(jnp.float32)
    losses = []
    for i, q in enumerate(quantiles):
        errors = t - p[..., i]
        losses.append(jnp.maximum((q - 1.0) * errors, q * errors))
    return jnp.mean(jnp.stack(losses, axis=1))


if __name__ == "__main__":
    # Module config: deterministic quantiles (no learnable parameters).
    quantiles = [0.1, 0.5, 0.9]
    Q = len(quantiles)

    key = jax.random.PRNGKey(0)
    k1, k2, k3, k4, k5, k6 = jax.random.split(key, 6)

    # (1) Small f32 shapes consistent with a multi-quantile seq forecaster:
    #     preds (batch=2, seq=8, Q=3), target (2, 8).  Single grid tile.
    B, T = 2, 8
    preds = jax.random.normal(k1, (B, T, Q), dtype=jnp.float32)
    target = jax.random.normal(k2, (B, T), dtype=jnp.float32)
    loss = jax.block_until_ready(quantile_loss(preds, target, quantiles))
    ref = quantile_loss_ref(preds, target, quantiles)
    assert np.allclose(np.asarray(loss), np.asarray(ref),
                       rtol=1e-4, atol=1e-5), (loss, ref)

    # (2) f32, N not a multiple of 128, multiple grid tiles + in-kernel row mask.
    B2, T2 = 4, 300
    preds2 = jax.random.normal(k3, (B2, T2, Q), dtype=jnp.float32)
    target2 = jax.random.normal(k4, (B2, T2), dtype=jnp.float32)
    ref2 = quantile_loss_ref(preds2, target2, quantiles)
    loss2 = jax.block_until_ready(
        quantile_loss(preds2, target2, quantiles, tile_rows=8))
    assert np.allclose(np.asarray(loss2), np.asarray(ref2),
                       rtol=1e-4, atol=1e-5), (loss2, ref2)
    loss2b = jax.block_until_ready(quantile_loss(preds2, target2, quantiles))
    assert np.allclose(np.asarray(loss2b), np.asarray(ref2),
                       rtol=1e-4, atol=1e-5), (loss2b, ref2)

    # (3) bf16 inputs -> single-pass bf16 broadcast-matmul path.
    B3, T3 = 2, 192
    preds3 = jax.random.normal(k5, (B3, T3, Q), dtype=jnp.float32).astype(jnp.bfloat16)
    target3 = jax.random.normal(k6, (B3, T3), dtype=jnp.float32).astype(jnp.bfloat16)
    loss3 = jax.block_until_ready(quantile_loss(preds3, target3, quantiles))
    ref3 = quantile_loss_ref(preds3, target3, quantiles)
    assert np.allclose(np.asarray(loss3), np.asarray(ref3),
                       rtol=1e-4, atol=1e-5), (loss3, ref3)

    print("KERNEL_OK")
</pallas_src>

<mosaic_0001>
module attributes {stable_mosaic.version = 11 : i64} {
  func.func @kernel(%arg0: i32, %arg1: memref<8x384xf32, #tpu.memory_space<vmem>>, %arg2: memref<8x128xf32, #tpu.memory_space<vmem>>, %arg3: memref<1x8x384xf32, #tpu.memory_space<vmem>>) attributes {dimension_semantics = [#tpu.dimension_semantics<parallel>], iteration_bounds = array<i64: 1>, scalar_prefetch = 0 : i64, scratch_operands = 0 : i64, tpu.core_type = #tpu.core_type<tc>, window_params = [{transform_indices = @transform_0, window_bounds = array<i64: 8, 384>}, {transform_indices = @transform_1, window_bounds = array<i64: 8, 128>}, {transform_indices = @transform_2, window_bounds = array<i64: 1, 8, 384>}]} {
    %0 = tpu.iota {dimensions = array<i32: 0>} : vector<128x384xi32>
    %1 = tpu.iota {dimensions = array<i32: 1>} : vector<128x384xi32>
    %c3_i32 = arith.constant 3 : i32
    %2 = vector.broadcast %c3_i32 : i32 to vector<128x384xi32>
    %3 = arith.muli %0, %2 : vector<128x384xi32>
    %4 = arith.subi %1, %3 : vector<128x384xi32>
    %c0_i32 = arith.constant 0 : i32
    %5 = vector.broadcast %c0_i32 : i32 to vector<128x384xi32>
    %6 = arith.cmpi sge, %4, %5 : vector<128x384xi32>
    %c3_i32_0 = arith.constant 3 : i32
    %7 = vector.broadcast %c3_i32_0 : i32 to vector<128x384xi32>
    %8 = arith.cmpi slt, %4, %7 : vector<128x384xi32>
    %9 = arith.andi %6, %8 : vector<128x384xi1>
    %cst = arith.constant 1.000000e+00 : f32
    %cst_1 = arith.constant 0.000000e+00 : f32
    %10 = vector.broadcast %cst : f32 to vector<128x384xf32>
    %11 = vector.broadcast %cst_1 : f32 to vector<128x384xf32>
    %12 = arith.select %9, %10, %11 : vector<128x384xi1>, vector<128x384xf32>
    %13 = tpu.iota {dimensions = array<i32: 1>} : vector<1x384xi32>
    %14 = arith.sitofp %13 : vector<1x384xi32> to vector<1x384xf32>
    %cst_2 = arith.constant 5.000000e-01 : f32
    %15 = vector.broadcast %cst_2 : f32 to vector<1x384xf32>
    %16 = arith.addf %14, %15 : vector<1x384xf32>
    %cst_3 = arith.constant 0.333333343 : f32
    %17 = vector.broadcast %cst_3 : f32 to vector<1x384xf32>
    %18 = arith.mulf %16, %17 : vector<1x384xf32>
    %19 = math.floor %18 : vector<1x384xf32>
    %cst_4 = arith.constant 3.000000e+00 : f32
    %20 = vector.broadcast %cst_4 : f32 to vector<1x384xf32>
    %21 = arith.mulf %20, %19 : vector<1x384xf32>
    %22 = arith.subf %14, %21 : vector<1x384xf32>
    %cst_5 = arith.constant 0.000000e+00 : f32
    %23 = vector.broadcast %cst_5 : f32 to vector<1x384xf32>
    %cst_6 = arith.constant 0.000000e+00 : f32
    %24 = vector.broadcast %cst_6 : f32 to vector<1x384xf32>
    %25 = arith.cmpf oeq, %22, %24 : vector<1x384xf32>
    %cst_7 = arith.constant 1.000000e-01 : f32
    %26 = vector.broadcast %cst_7 : f32 to vector<1x384xf32>
    %27 = arith.select %25, %26, %23 : vector<1x384xi1>, vector<1x384xf32>
    %cst_8 = arith.constant 1.000000e+00 : f32
    %28 = vector.broadcast %cst_8 : f32 to vector<1x384xf32>
    %29 = arith.cmpf oeq, %22, %28 : vector<1x384xf32>
    %cst_9 = arith.constant 5.000000e-01 : f32
    %30 = vector.broadcast %cst_9 : f32 to vector<1x384xf32>
    %31 = arith.select %29, %30, %27 : vector<1x384xi1>, vector<1x384xf32>
    %cst_10 = arith.constant 2.000000e+00 : f32
    %32 = vector.broadcast %cst_10 : f32 to vector<1x384xf32>
    %33 = arith.cmpf oeq, %22, %32 : vector<1x384xf32>
    %cst_11 = arith.constant 0.899999976 : f32
    %34 = vector.broadcast %cst_11 : f32 to vector<1x384xf32>
    %35 = arith.select %33, %34, %31 : vector<1x384xi1>, vector<1x384xf32>
    %c0 = arith.constant 0 : index
    %c0_12 = arith.constant 0 : index
    %36 = vector.load %arg2[%c0, %c0_12] : memref<8x128xf32, #tpu.memory_space<vmem>>, vector<8x128xf32>
    %cst_13 = arith.constant dense<0.000000e+00> : vector<8x384xf32>
    %37 = tpu.matmul %36, %12, %cst_13 {dimension_numbers = #tpu.dot_dimension_numbers<[1], [0], [0], [1], [0, 0, 1, 1], [], []>, precision = #tpu.contract_precision<fp32>} : vector<8x128xf32>, vector<128x384xf32>, vector<8x384xf32> -> vector<8x384xf32>
    %c0_14 = arith.constant 0 : index
    %c0_15 = arith.constant 0 : index
    %38 = vector.load %arg1[%c0_14, %c0_15] : memref<8x384xf32, #tpu.memory_space<vmem>>, vector<8x384xf32>
    %39 = arith.subf %37, %38 : vector<8x384xf32>
    %40 = vector.broadcast %35 : vector<1x384xf32> to vector<8x384xf32>
    %41 = arith.mulf %40, %39 : vector<8x384xf32>
    %cst_16 = arith.constant 0.000000e+00 : f32
    %42 = vector.broadcast %cst_16 : f32 to vector<8x384xf32>
    %43 = arith.minimumf %39, %42 : vector<8x384xf32>
    %44 = arith.subf %41, %43 : vector<8x384xf32>
    %45 = vector.shape_cast %44 : vector<8x384xf32> to vector<1x8x384xf32>
    %cst_17 = arith.constant dense<0.000000e+00> : vector<8x384xf32>
    %46 = vector.multi_reduction <add>, %45, %cst_17 [0] : vector<1x8x384xf32> to vector<8x384xf32>
    %c0_18 = arith.constant 0 : index
    %c0_19 = arith.constant 0 : index
    %c0_20 = arith.constant 0 : index
    %47 = vector.load %arg3[%c0_18, %c0_19, %c0_20] : memref<1x8x384xf32, #tpu.memory_space<vmem>>, vector<1x8x384xf32>
    %48 = vector.shape_cast %47 : vector<1x8x384xf32> to vector<8x384xf32>
    %49 = vector.shape_cast %46 : vector<8x384xf32> to vector<1x8x384xf32>
    tpu.vector_store %arg3[%c0_18, %c0_19, %c0_20], %49 {strides = array<i32>} : memref<1x8x384xf32, #tpu.memory_space<vmem>>, vector<1x8x384xf32>,
    return
  }
  func.func @transform_0(%arg0: i32) -> (i32, i32) {
    %c0_i32 = arith.constant 0 : i32
    %c0_i32_0 = arith.constant 0 : i32
    return %arg0, %c0_i32 : i32, i32
  }
  func.func @transform_1(%arg0: i32) -> (i32, i32) {
    %c0_i32 = arith.constant 0 : i32
    %c0_i32_0 = arith.constant 0 : i32
    return %arg0, %c0_i32 : i32, i32
  }
  func.func @transform_2(%arg0: i32) -> (i32, i32, i32) {
    %c0_i32 = arith.constant 0 : i32
    %c0_i32_0 = arith.constant 0 : i32
    %c0_i32_1 = arith.constant 0 : i32
    return %arg0, %c0_i32, %c0_i32_0 : i32, i32, i32
  }
}

</mosaic_0001>

<llo_original>
// kernel: tpu_custom_call.1
$region0: #{tpu_custom_call.1}
  #allocation0 [shape = 'u32[]', space=smem, size = 0x4, offset = 0x4, fixed_abs, tag = 'smem constant byte address 0x4 - core index']
  #allocation1 [shape = 'u32[144,128]{1,0:T(1,128)}', space=vmem, size = 0x12000, scoped, tag = 'internal scratch']
  %s0 = inlined_call_operand.hbm [shape: f32[8,384], index: 0, kind: input, shape index: {}]
  %s1 = inlined_call_operand.hbm [shape: f32[8,128], index: 1, kind: input, shape index: {}]
  %s2 = inlined_call_operand.hbm [shape: f32[1,8,384], index: 2, kind: output, shape index: {}]
  %s3 = sld [smem:[#allocation0]]
  $region26: #{tpu_custom_call.1} parent=0
    _
  %s5 = ssub.s32 1, %s3
  %s6 = scalar_select 0, %s5, %s3
  $region1: #{tpu_custom_call.1} parent=0
    #allocation2 [shape = 'u8[12288]{0}', space=vmem, size = 0x3000, scoped, tag = 'input window, operand 0, single buffered']
    #allocation3 [shape = 's32[1]{0}', space=sflag, size = 0x4, scoped, tag = 'scoped memory for tpu_custom_call.1']
    #allocation4 [shape = 's32[1]{0}', space=sflag, size = 0x4, scoped, tag = 'scoped memory for tpu_custom_call.1']
    #allocation5 [shape = 'u8[4096]{0}', space=vmem, size = 0x1000, scoped, tag = 'input window, operand 1, single buffered']
    #allocation6 [shape = 's32[1]{0}', space=sflag, size = 0x4, scoped, tag = 'scoped memory for tpu_custom_call.1']
    #allocation7 [shape = 'u8[12288]{0}', space=vmem, size = 0x3000, scoped, tag = 'output window, operand 0, single buffered']
    %7 = vsyncpa [#allocation3], 0
    %8 = vsyncpa [#allocation6], 0
    %9 = vsyncpa [#allocation4], 0
    // Predicated region
    $region2: #{tpu_custom_call.1} parent=1 // pred_check
      _
    $region3: #{tpu_custom_call.1} parent=1 // pred_check_branch
      %11 = sbr.rel (0) target = $region5
    $region4: #{tpu_custom_call.1} parent=1 // pred_region
      %s13 = ssub.s32 384, 384
      %14 = vsyncadd [#allocation3], %s13
      %s16 = sshll.u32 [#allocation2], 4
      %s17 = int_to_ptr.vmem [resolvable:$true] %s16
      %19 = dma.hbm_to_vmem [thread:$0]  %s0, 384, %s17, [#allocation3]
    $region5: #{tpu_custom_call.1} parent=1 // pred_fallthru
      _
    // Predicated region
    $region6: #{tpu_custom_call.1} parent=1 // pred_check
      _
    $region7: #{tpu_custom_call.1} parent=1 // pred_check_branch
      %21 = sbr.rel (0) target = $region9
    $region8: #{tpu_custom_call.1} parent=1 // pred_region
      %s23 = ssub.s32 128, 128
      %24 = vsyncadd [#allocation6], %s23
      %s26 = sshll.u32 [#allocation5], 4
      %s27 = int_to_ptr.vmem [resolvable:$true] %s26
      %29 = dma.hbm_to_vmem [thread:$0]  %s1, 128, %s27, [#allocation6]
    $region9: #{tpu_custom_call.1} parent=1 // pred_fallthru
      _
    // Predicated region
    $region10: #{tpu_custom_call.1} parent=1 // pred_check
      _
    $region11: #{tpu_custom_call.1} parent=1 // pred_check_branch
      %31 = sbr.rel (0) target = $region13
    $region12: #{tpu_custom_call.1} parent=1 // pred_region
      %32 = dma.done [#allocation3], 384
    $region13: #{tpu_custom_call.1} parent=1 // pred_fallthru
      _
    // Predicated region
    $region14: #{tpu_custom_call.1} parent=1 // pred_check
      _
    $region15: #{tpu_custom_call.1} parent=1 // pred_check_branch
      %34 = sbr.rel (0) target = $region17
    $region16: #{tpu_custom_call.1} parent=1 // pred_region
      %35 = dma.done [#allocation6], 128
    $region17: #{tpu_custom_call.1} parent=1 // pred_fallthru
      _
    %v36 = vlaneseq
    %v37 = vshrl.u32 %v36, 7
    %v38 = vadd.s32 %v37, 8
    %v39 = vadd.s32 %v37, 16
    %v40 = vadd.s32 %v37, 24
    %v41 = vadd.s32 %v37, 32
    %v42 = vadd.s32 %v37, 40
    %v43 = vadd.s32 %v37, 48
    %v44 = vadd.s32 %v37, 56
    %v45 = vadd.s32 %v37, 64
    %v46 = vadd.s32 %v37, 72
    %v47 = vadd.s32 %v37, 80
    %v48 = vadd.s32 %v37, 88
    %v49 = vadd.s32 %v37, 96
    %v50 = vadd.s32 %v37, 104
    %v51 = vadd.s32 %v37, 112
    %v52 = vadd.s32 %v37, 120
    %v53 = vlaneseq
    %v54 = vand.u32 %v53, 127
    %v55 = vadd.s32 %v54, 128
    %v56 = vadd.s32 %v54, 256
    %v57 = vmul.u32 %v37, 3
    %v58 = vmul.u32 %v38, 3
    %v59 = vmul.u32 %v39, 3
    %v60 = vmul.u32 %v40, 3
    %v61 = vmul.u32 %v41, 3
    %v62 = vmul.u32 %v42, 3
    %v63 = vmul.u32 %v43, 3
    %v64 = vmul.u32 %v44, 3
    %v65 = vmul.u32 %v45, 3
    %v66 = vmul.u32 %v46, 3
    %v67 = vmul.u32 %v47, 3
    %v68 = vmul.u32 %v48, 3
    %v69 = vmul.u32 %v49, 3
    %v70 = vmul.u32 %v50, 3
    %v71 = vmul.u32 %v51, 3
    %v72 = vmul.u32 %v52, 3
    %v73 = vsub.s32 %v54, %v57
    %v74 = vsub.s32 %v55, %v57
    %v75 = vsub.s32 %v56, %v57
    %v76 = vsub.s32 %v54, %v58
    %v77 = vsub.s32 %v55, %v58
    %v78 = vsub.s32 %v56, %v58
    %v79 = vsub.s32 %v54, %v59
    %v80 = vsub.s32 %v55, %v59
    %v81 = vsub.s32 %v56, %v59
    %v82 = vsub.s32 %v54, %v60
    %v83 = vsub.s32 %v55, %v60
    %v84 = vsub.s32 %v56, %v60
    %v85 = vsub.s32 %v54, %v61
    %v86 = vsub.s32 %v55, %v61
    %v87 = vsub.s32 %v56, %v61
    %v88 = vsub.s32 %v54, %v62
    %v89 = vsub.s32 %v55, %v62
    %v90 = vsub.s32 %v56, %v62
    %v91 = vsub.s32 %v54, %v63
    %v92 = vsub.s32 %v55, %v63
    %v93 = vsub.s32 %v56, %v63
    %v94 = vsub.s32 %v54, %v64
    %v95 = vsub.s32 %v55, %v64
    %v96 = vsub.s32 %v56, %v64
    %v97 = vsub.s32 %v54, %v65
    %v98 = vsub.s32 %v55, %v65
    %v99 = vsub.s32 %v56, %v65
    %v100 = vsub.s32 %v54, %v66
    %v101 = vsub.s32 %v55, %v66
    %v102 = vsub.s32 %v56, %v66
    %v103 = vsub.s32 %v54, %v67
    %v104 = vsub.s32 %v55, %v67
    %v105 = vsub.s32 %v56, %v67
    %v106 = vsub.s32 %v54, %v68
    %v107 = vsub.s32 %v55, %v68
    %v108 = vsub.s32 %v56, %v68
    %v109 = vsub.s32 %v54, %v69
    %v110 = vsub.s32 %v55, %v69
    %v111 = vsub.s32 %v56, %v69
    %v112 = vsub.s32 %v54, %v70
    %v113 = vsub.s32 %v55, %v70
    %v114 = vsub.s32 %v56, %v70
    %v115 = vsub.s32 %v54, %v71
    %v116 = vsub.s32 %v55, %v71
    %v117 = vsub.s32 %v56, %v71
    %v118 = vsub.s32 %v54, %v72
    %v119 = vsub.s32 %v55, %v72
    %v120 = vsub.s32 %v56, %v72
    %vm121 = vcmp.ge.s32.totalorder %v73, 0
    %vm122 = vcmp.ge.s32.totalorder %v74, 0
    %vm123 = vcmp.ge.s32.totalorder %v75, 0
    %vm124 = vcmp.ge.s32.totalorder %v76, 0
    %vm125 = vcmp.ge.s32.totalorder %v77, 0
    %vm126 = vcmp.ge.s32.totalorder %v78, 0
    %vm127 = vcmp.ge.s32.totalorder %v79, 0
    %vm128 = vcmp.ge.s32.totalorder %v80, 0
    %vm129 = vcmp.ge.s32.totalorder %v81, 0
    %vm130 = vcmp.ge.s32.totalorder %v82, 0
    %vm131 = vcmp.ge.s32.totalorder %v83, 0
    %vm132 = vcmp.ge.s32.totalorder %v84, 0
    %vm133 = vcmp.ge.s32.totalorder %v85, 0
    %vm134 = vcmp.ge.s32.totalorder %v86, 0
    %vm135 = vcmp.ge.s32.totalorder %v87, 0
    %vm136 = vcmp.ge.s32.totalorder %v88, 0
    %vm137 = vcmp.ge.s32.totalorder %v89, 0
    %vm138 = vcmp.ge.s32.totalorder %v90, 0
    %vm139 = vcmp.ge.s32.totalorder %v91, 0
    %vm140 = vcmp.ge.s32.totalorder %v92, 0
    %vm141 = vcmp.ge.s32.totalorder %v93, 0
    %vm142 = vcmp.ge.s32.totalorder %v94, 0
    %vm143 = vcmp.ge.s32.totalorder %v95, 0
    %vm144 = vcmp.ge.s32.totalorder %v96, 0
    %vm145 = vcmp.ge.s32.totalorder %v97, 0
    %vm146 = vcmp.ge.s32.totalorder %v98, 0
    %vm147 = vcmp.ge.s32.totalorder %v99, 0
    %vm148 = vcmp.ge.s32.totalorder %v100, 0
    %vm149 = vcmp.ge.s32.totalorder %v101, 0
    %vm150 = vcmp.ge.s32.totalorder %v102, 0
    %vm151 = vcmp.ge.s32.totalorder %v103, 0
    %vm152 = vcmp.ge.s32.totalorder %v104, 0
    %vm153 = vcmp.ge.s32.totalorder %v105, 0
    %vm154 = vcmp.ge.s32.totalorder %v106, 0
    %vm155 = vcmp.ge.s32.totalorder %v107, 0
    %vm156 = vcmp.ge.s32.totalorder %v108, 0
    %vm157 = vcmp.ge.s32.totalorder %v109, 0
    %vm158 = vcmp.ge.s32.totalorder %v110, 0
    %vm159 = vcmp.ge.s32.totalorder %v111, 0
    %vm160 = vcmp.ge.s32.totalorder %v112, 0
    %vm161 = vcmp.ge.s32.totalorder %v113, 0
    %vm162 = vcmp.ge.s32.totalorder %v114, 0
    %vm163 = vcmp.ge.s32.totalorder %v115, 0
    %vm164 = vcmp.ge.s32.totalorder %v116, 0
    %vm165 = vcmp.ge.s32.totalorder %v117, 0
    %vm166 = vcmp.ge.s32.totalorder %v118, 0
    %vm167 = vcmp.ge.s32.totalorder %v119, 0
    %vm168 = vcmp.ge.s32.totalorder %v120, 0
    %vm169 = vcmp.lt.s32.totalorder %v73, 3
    %vm170 = vcmp.lt.s32.totalorder %v74, 3
    %vm171 = vcmp.lt.s32.totalorder %v75, 3
    %vm172 = vcmp.lt.s32.totalorder %v76, 3
    %vm173 = vcmp.lt.s32.totalorder %v77, 3
    %vm174 = vcmp.lt.s32.totalorder %v78, 3
    %vm175 = vcmp.lt.s32.totalorder %v79, 3
    %vm176 = vcmp.lt.s32.totalorder %v80, 3
    %vm177 = vcmp.lt.s32.totalorder %v81, 3
    %vm178 = vcmp.lt.s32.totalorder %v82, 3
    %vm179 = vcmp.lt.s32.totalorder %v83, 3
    %vm180 = vcmp.lt.s32.totalorder %v84, 3
    %vm181 = vcmp.lt.s32.totalorder %v85, 3
    %vm182 = vcmp.lt.s32.totalorder %v86, 3
    %vm183 = vcmp.lt.s32.totalorder %v87, 3
    %vm184 = vcmp.lt.s32.totalorder %v88, 3
    %vm185 = vcmp.lt.s32.totalorder %v89, 3
    %vm186 = vcmp.lt.s32.totalorder %v90, 3
    %vm187 = vcmp.lt.s32.totalorder %v91, 3
    %vm188 = vcmp.lt.s32.totalorder %v92, 3
    %vm189 = vcmp.lt.s32.totalorder %v93, 3
    %vm190 = vcmp.lt.s32.totalorder %v94, 3
    %vm191 = vcmp.lt.s32.totalorder %v95, 3
    %vm192 = vcmp.lt.s32.totalorder %v96, 3
    %vm193 = vcmp.lt.s32.totalorder %v97, 3
    %vm194 = vcmp.lt.s32.totalorder %v98, 3
    %vm195 = vcmp.lt.s32.totalorder %v99, 3
    %vm196 = vcmp.lt.s32.totalorder %v100, 3
    %vm197 = vcmp.lt.s32.totalorder %v101, 3
    %vm198 = vcmp.lt.s32.totalorder %v102, 3
    %vm199 = vcmp.lt.s32.totalorder %v103, 3
    %vm200 = vcmp.lt.s32.totalorder %v104, 3
    %vm201 = vcmp.lt.s32.totalorder %v105, 3
    %vm202 = vcmp.lt.s32.totalorder %v106, 3
    %vm203 = vcmp.lt.s32.totalorder %v107, 3
    %vm204 = vcmp.lt.s32.totalorder %v108, 3
    %vm205 = vcmp.lt.s32.totalorder %v109, 3
    %vm206 = vcmp.lt.s32.totalorder %v110, 3
    %vm207 = vcmp.lt.s32.totalorder %v111, 3
    %vm208 = vcmp.lt.s32.totalorder %v112, 3
    %vm209 = vcmp.lt.s32.totalorder %v113, 3
    %vm210 = vcmp.lt.s32.totalorder %v114, 3
    %vm211 = vcmp.lt.s32.totalorder %v115, 3
    %vm212 = vcmp.lt.s32.totalorder %v116, 3
    %vm213 = vcmp.lt.s32.totalorder %v117, 3
    %vm214 = vcmp.lt.s32.totalorder %v118, 3
    %vm215 = vcmp.lt.s32.totalorder %v119, 3
    %vm216 = vcmp.lt.s32.totalorder %v120, 3
    %vm217 = vmand %vm121, %vm169
    %vm218 = vmand %vm122, %vm170
    %vm219 = vmand %vm123, %vm171
    %vm220 = vmand %vm124, %vm172
    %vm221 = vmand %vm125, %vm173
    %vm222 = vmand %vm126, %vm174
    %vm223 = vmand %vm127, %vm175
    %vm224 = vmand %vm128, %vm176
    %vm225 = vmand %vm129, %vm177
    %vm226 = vmand %vm130, %vm178
    %vm227 = vmand %vm131, %vm179
    %vm228 = vmand %vm132, %vm180
    %vm229 = vmand %vm133, %vm181
    %vm230 = vmand %vm134, %vm182
    %vm231 = vmand %vm135, %vm183
    %vm232 = vmand %vm136, %vm184
    %vm233 = vmand %vm137, %vm185
    %vm234 = vmand %vm138, %vm186
    %vm235 = vmand %vm139, %vm187
    %vm236 = vmand %vm140, %vm188
    %vm237 = vmand %vm141, %vm189
    %vm238 = vmand %vm142, %vm190
    %vm239 = vmand %vm143, %vm191
    %vm240 = vmand %vm144, %vm192
    %vm241 = vmand %vm145, %vm193
    %vm242 = vmand %vm146, %vm194
    %vm243 = vmand %vm147, %vm195
    %vm244 = vmand %vm148, %vm196
    %vm245 = vmand %vm149, %vm197
    %vm246 = vmand %vm150, %vm198
    %vm247 = vmand %vm151, %vm199
    %vm248 = vmand %vm152, %vm200
    %vm249 = vmand %vm153, %vm201
    %vm250 = vmand %vm154, %vm202
    %vm251 = vmand %vm155, %vm203
    %vm252 = vmand %vm156, %vm204
    %vm253 = vmand %vm157, %vm205
    %vm254 = vmand %vm158, %vm206
    %vm255 = vmand %vm159, %vm207
    %vm256 = vmand %vm160, %vm208
    %vm257 = vmand %vm161, %vm209
    %vm258 = vmand %vm162, %vm210
    %vm259 = vmand %vm163, %vm211
    %vm260 = vmand %vm164, %vm212
    %vm261 = vmand %vm165, %vm213
    %vm262 = vmand %vm166, %vm214
    %vm263 = vmand %vm167, %vm215
    %vm264 = vmand %vm168, %vm216
    %v265 = vsel %vm217, 1.0, 0.0
    %v266 = vsel %vm218, 1.0, 0.0
    %v267 = vsel %vm219, 1.0, 0.0
    %v268 = vsel %vm220, 1.0, 0.0
    %v269 = vsel %vm221, 1.0, 0.0
    %v270 = vsel %vm222, 1.0, 0.0
    %v271 = vsel %vm223, 1.0, 0.0
    %v272 = vsel %vm224, 1.0, 0.0
    %v273 = vsel %vm225, 1.0, 0.0
    %v274 = vsel %vm226, 1.0, 0.0
    %v275 = vsel %vm227, 1.0, 0.0
    %v276 = vsel %vm228, 1.0, 0.0
    %v277 = vsel %vm229, 1.0, 0.0
    %v278 = vsel %vm230, 1.0, 0.0
    %v279 = vsel %vm231, 1.0, 0.0
    %v280 = vsel %vm232, 1.0, 0.0
    %v281 = vsel %vm233, 1.0, 0.0
    %v282 = vsel %vm234, 1.0, 0.0
    %v283 = vsel %vm235, 1.0, 0.0
    %v284 = vsel %vm236, 1.0, 0.0
    %v285 = vsel %vm237, 1.0, 0.0
    %v286 = vsel %vm238, 1.0, 0.0
    %v287 = vsel %vm239, 1.0, 0.0
    %v288 = vsel %vm240, 1.0, 0.0
    %v289 = vsel %vm241, 1.0, 0.0
    %v290 = vsel %vm242, 1.0, 0.0
    %v291 = vsel %vm243, 1.0, 0.0
    %v292 = vsel %vm244, 1.0, 0.0
    %v293 = vsel %vm245, 1.0, 0.0
    %v294 = vsel %vm246, 1.0, 0.0
    %v295 = vsel %vm247, 1.0, 0.0
    %v296 = vsel %vm248, 1.0, 0.0
    %v297 = vsel %vm249, 1.0, 0.0
    %v298 = vsel %vm250, 1.0, 0.0
    %v299 = vsel %vm251, 1.0, 0.0
    %v300 = vsel %vm252, 1.0, 0.0
    %v301 = vsel %vm253, 1.0, 0.0
    %v302 = vsel %vm254, 1.0, 0.0
    %v303 = vsel %vm255, 1.0, 0.0
    %v304 = vsel %vm256, 1.0, 0.0
    %v305 = vsel %vm257, 1.0, 0.0
    %v306 = vsel %vm258, 1.0, 0.0
    %v307 = vsel %vm259, 1.0, 0.0
    %v308 = vsel %vm260, 1.0, 0.0
    %v309 = vsel %vm261, 1.0, 0.0
    %v310 = vsel %vm262, 1.0, 0.0
    %v311 = vsel %vm263, 1.0, 0.0
    %v312 = vsel %vm264, 1.0, 0.0
    %v313 = vcvt.s32.f32 %v54
    %v314 = vcvt.s32.f32 %v55
    %v315 = vcvt.s32.f32 %v56
    %v316 = vadd.f32 %v313, 0.5
    %v317 = vadd.f32 %v314, 0.5
    %v318 = vadd.f32 %v315, 0.5
    %v319 = vmul.f32 %v316, 0.33333334
    %v320 = vmul.f32 %v317, 0.33333334
    %v321 = vmul.f32 %v318, 0.33333334
    %v322 = vfloor.f32 %v319
    %v323 = vfloor.f32 %v320
    %v324 = vfloor.f32 %v321
    %v325 = vmul.f32 %v322, 3.0
    %v326 = vmul.f32 %v323, 3.0
    %v327 = vmul.f32 %v324, 3.0
    %v328 = vsub.f32 %v313, %v325
    %v329 = vsub.f32 %v314, %v326
    %v330 = vsub.f32 %v315, %v327
    %vm331 = vcmp.eq.f32.partialorder %v328, 0.0
    %vm332 = vcmp.eq.f32.partialorder %v329, 0.0
    %vm333 = vcmp.eq.f32.partialorder %v330, 0.0
    %v334 = vsel %vm331, 0.1, 0.0
    %v335 = vsel %vm332, 0.1, 0.0
    %v336 = vsel %vm333, 0.1, 0.0
    %vm337 = vcmp.eq.f32.partialorder %v328, 1.0
    %vm338 = vcmp.eq.f32.partialorder %v329, 1.0
    %vm339 = vcmp.eq.f32.partialorder %v330, 1.0
    %v340 = vsel %vm337, 0.5, %v334
    %v341 = vsel %vm338, 0.5, %v335
    %v342 = vsel %vm339, 0.5, %v336
    %vm343 = vcmp.eq.f32.partialorder %v328, 2.0
    %vm344 = vcmp.eq.f32.partialorder %v329, 2.0
    %vm345 = vcmp.eq.f32.partialorder %v330, 2.0
    %v346 = vsel %vm343, 0.9, %v340
    %v347 = vsel %vm344, 0.9, %v341
    %v348 = vsel %vm345, 0.9, %v342
    %v349 = vld [vmem:[#allocation5] sm:$0xff]
    %350 = vmatprep.subr.mxu0 %v266
    %351 = vmatpush1.msra.mxu0 %v265
    %352 = vmatprep.subr.mxu0 %v269
    %353 = vmatpush1.msra.mxu0 %v268
    %354 = vmatprep.subr.mxu0 %v272
    %355 = vmatpush1.msra.mxu0 %v271
    %356 = vmatprep.subr.mxu0 %v275
    %357 = vmatpush1.msra.mxu0 %v274
    %358 = vmatprep.subr.mxu0 %v278
    %359 = vmatpush1.msra.mxu0 %v277
    %360 = vmatprep.subr.mxu0 %v281
    %361 = vmatpush1.msra.mxu0 %v280
    %362 = vmatprep.subr.mxu0 %v284
    %363 = vmatpush1.msra.mxu0 %v283
    %364 = vmatprep.subr.mxu0 %v287
    %365 = vmatpush1.msra.mxu0 %v286
    %366 = vmatprep.subr.mxu0 %v290
    %367 = vmatpush1.msra.mxu0 %v289
    %368 = vmatprep.subr.mxu0 %v293
    %369 = vmatpush1.msra.mxu0 %v292
    %370 = vmatprep.subr.mxu0 %v296
    %371 = vmatpush1.msra.mxu0 %v295
    %372 = vmatprep.subr.mxu0 %v299
    %373 = vmatpush1.msra.mxu0 %v298
    %374 = vmatprep.subr.mxu0 %v302
    %375 = vmatpush1.msra.mxu0 %v301
    %376 = vmatprep.subr.mxu0 %v305
    %377 = vmatpush1.msra.mxu0 %v304
    %378 = vmatprep.subr.mxu0 %v308
    %379 = vmatpush1.msra.mxu0 %v307
    %380 = vmatprep.subr.mxu0 %v311
    %381 = vmatpush1.msra.mxu0 %v310
    %382 = vmatprep.subr.mxu0 0.0
    %383 = vmatpush1.msra.mxu0 0.0
    %384 = vmatprep.subr.mxu0 0.0
    %385 = vmatpush1.msra.mxu0 0.0
    %386 = vmatprep.subr.mxu0 0.0
    %387 = vmatpush1.msra.mxu0 0.0
    %388 = vmatprep.subr.mxu0 0.0
    %389 = vmatpush1.msra.mxu0 0.0
    %390 = vmatprep.subr.mxu0 0.0
    %391 = vmatpush1.msra.mxu0 0.0
    %392 = vmatprep.subr.mxu0 0.0
    %393 = vmatpush1.msra.mxu0 0.0
    %394 = vmatprep.subr.mxu0 0.0
    %395 = vmatpush1.msra.mxu0 0.0
    %396 = vmatprep.subr.mxu0 0.0
    %397 = vmatpush1.msra.mxu0 0.0
    %398 = vmatprep.subr.mxu0 0.0
    %399 = vmatpush1.msra.mxu0 0.0
    %400 = vmatprep.subr.mxu0 0.0
    %401 = vmatpush1.msra.mxu0 0.0
    %402 = vmatprep.subr.mxu0 0.0
    %403 = vmatpush1.msra.mxu0 0.0
    %404 = vmatprep.subr.mxu0 0.0
    %405 = vmatpush1.msra.mxu0 0.0
    %406 = vmatprep.subr.mxu0 0.0
    %407 = vmatpush1.msra.mxu0 0.0
    %408 = vmatprep.subr.mxu0 0.0
    %409 = vmatpush1.msra.mxu0 0.0
    %410 = vmatprep.subr.mxu0 0.0
    %411 = vmatpush1.msra.mxu0 0.0
    %412 = vmatprep.subr.mxu0 0.0
    %413 = vmatpush1.msra.mxu0 0.0
    %414 = vmatprep.mubr.f32.mxu0 0.0
    %v415 = vand.u32 %v349, 4294901760
    %v416 = vsub.f32 %v349, %v415
    %v417 = vand.u32 %v416, 4294901760
    %v418 = vsub.f32 %v416, %v417
    %v419 = vand.u32 %v418, 4294901760
    %420 = vmatmul.mubr.f32.gmra.mrb[0].mxu0 %v419
    %v421 = vpop.f32.mrb[0].mxu0
    %v422 = vadd.f32 0.0, %v421
    %v423 = vpop.f32.mrb[0].mxu0
    %v424 = vadd.f32 0.0, %v423
    %425 = vdwg.mxu0
    %v426 = vsub.f32 %v266, %v266
    %v427 = vand.u32 %v426, 4294901760
    %v428 = vsub.f32 %v426, %v427
    %v429 = vand.u32 %v428, 4294901760
    %430 = vmatprep.subr.mxu0 %v429
    %v431 = vsub.f32 %v265, %v265
    %v432 = vand.u32 %v431, 4294901760
    %v433 = vsub.f32 %v431, %v432
    %v434 = vand.u32 %v433, 4294901760
    %435 = vmatpush1.msra.mxu0 %v434
    %v436 = vsub.f32 %v269, %v269
    %v437 = vand.u32 %v436, 4294901760
    %v438 = vsub.f32 %v436, %v437
    %v439 = vand.u32 %v438, 4294901760
    %440 = vmatprep.subr.mxu0 %v439
    %v441 = vsub.f32 %v268, %v268
    %v442 = vand.u32 %v441, 4294901760
    %v443 = vsub.f32 %v441, %v442
    %v444 = vand.u32 %v443, 4294901760
    %445 = vmatpush1.msra.mxu0 %v444
    %v446 = vsub.f32 %v272, %v272
    %v447 = vand.u32 %v446, 4294901760
    %v448 = vsub.f32 %v446, %v447
    %v449 = vand.u32 %v448, 4294901760
    %450 = vmatprep.subr.mxu0 %v449
    %v451 = vsub.f32 %v271, %v271
    %v452 = vand.u32 %v451, 4294901760
    %v453 = vsub.f32 %v451, %v452
    %v454 = vand.u32 %v453, 4294901760
    %455 = vmatpush1.msra.mxu0 %v454
    %v456 = vsub.f32 %v275, %v275
    %v457 = vand.u32 %v456, 4294901760
    %v458 = vsub.f32 %v456, %v457
    %v459 = vand.u32 %v458, 4294901760
    %460 = vmatprep.subr.mxu0 %v459
    %v461 = vsub.f32 %v274, %v274
    %v462 = vand.u32 %v461, 4294901760
    %v463 = vsub.f32 %v461, %v462
    %v464 = vand.u32 %v463, 4294901760
    %465 = vmatpush1.msra.mxu0 %v464
    %v466 = vsub.f32 %v278, %v278
    %v467 = vand.u32 %v466, 4294901760
    %v468 = vsub.f32 %v466, %v467
    %v469 = vand.u32 %v468, 4294901760
    %470 = vmatprep.subr.mxu0 %v469
    %v471 = vsub.f32 %v277, %v277
    %v472 = vand.u32 %v471, 4294901760
    %v473 = vsub.f32 %v471, %v472
    %v474 = vand.u32 %v473, 4294901760
    %475 = vmatpush1.msra.mxu0 %v474
    %v476 = vsub.f32 %v281, %v281
    %v477 = vand.u32 %v476, 4294901760
    %v478 = vsub.f32 %v476, %v477
    %v479 = vand.u32 %v478, 4294901760
    %480 = vmatprep.subr.mxu0 %v479
    %v481 = vsub.f32 %v280, %v280
    %v482 = vand.u32 %v481, 4294901760
    %v483 = vsub.f32 %v481, %v482
    %v484 = vand.u32 %v483, 4294901760
    %485 = vmatpush1.msra.mxu0 %v484
    %v486 = vsub.f32 %v284, %v284
    %v487 = vand.u32 %v486, 4294901760
    %v488 = vsub.f32 %v486, %v487
    %v489 = vand.u32 %v488, 4294901760
    %490 = vmatprep.subr.mxu0 %v489
    %v491 = vsub.f32 %v283, %v283
    %v492 = vand.u32 %v491, 4294901760
    %v493 = vsub.f32 %v491, %v492
    %v494 = vand.u32 %v493, 4294901760
    %495 = vmatpush1.msra.mxu0 %v494
    %v496 = vsub.f32 %v287, %v287
    %v497 = vand.u32 %v496, 4294901760
    %v498 = vsub.f32 %v496, %v497
    %v499 = vand.u32 %v498, 4294901760
    %500 = vmatprep.subr.mxu0 %v499
    %v501 = vsub.f32 %v286, %v286
    %v502 = vand.u32 %v501, 4294901760
    %v503 = vsub.f32 %v501, %v502
    %v504 = vand.u32 %v503, 4294901760
    %505 = vmatpush1.msra.mxu0 %v504
    %v506 = vsub.f32 %v290, %v290
    %v507 = vand.u32 %v506, 4294901760
    %v508 = vsub.f32 %v506, %v507
    %v509 = vand.u32 %v508, 4294901760
    %510 = vmatprep.subr.mxu0 %v509
    %v511 = vsub.f32 %v289, %v289
    %v512 = vand.u32 %v511, 4294901760
    %v513 = vsub.f32 %v511, %v512
    %v514 = vand.u32 %v513, 4294901760
    %515 = vmatpush1.msra.mxu0 %v514
    %v516 = vsub.f32 %v293, %v293
    %v517 = vand.u32 %v516, 4294901760
    %v518 = vsub.f32 %v516, %v517
    %v519 = vand.u32 %v518, 4294901760
    %520 = vmatprep.subr.mxu0 %v519
    %v521 = vsub.f32 %v292, %v292
    %v522 = vand.u32 %v521, 4294901760
    %v523 = vsub.f32 %v521, %v522
    %v524 = vand.u32 %v523, 4294901760
    %525 = vmatpush1.msra.mxu0 %v524
    %v526 = vsub.f32 %v296, %v296
    %v527 = vand.u32 %v526, 4294901760
    %v528 = vsub.f32 %v526, %v527
    %v529 = vand.u32 %v528, 4294901760
    %530 = vmatprep.subr.mxu0 %v529
    %v531 = vsub.f32 %v295, %v295
    %v532 = vand.u32 %v531, 4294901760
    %v533 = vsub.f32 %v531, %v532
    %v534 = vand.u32 %v533, 4294901760
    %535 = vmatpush1.msra.mxu0 %v534
    %v536 = vsub.f32 %v299, %v299
    %v537 = vand.u32 %v536, 4294901760
    %v538 = vsub.f32 %v536, %v537
    %v539 = vand.u32 %v538, 4294901760
    %540 = vmatprep.subr.mxu0 %v539
    %v541 = vsub.f32 %v298, %v298
    %v542 = vand.u32 %v541, 4294901760
    %v543 = vsub.f32 %v541, %v542
    %v544 = vand.u32 %v543, 4294901760
    %545 = vmatpush1.msra.mxu0 %v544
    %v546 = vsub.f32 %v302, %v302
    %v547 = vand.u32 %v546, 4294901760
    %v548 = vsub.f32 %v546, %v547
    %v549 = vand.u32 %v548, 4294901760
    %550 = vmatprep.subr.mxu0 %v549
    %v551 = vsub.f32 %v301, %v301
    %v552 = vand.u32 %v551, 4294901760
    %v553 = vsub.f32 %v551, %v552
    %v554 = vand.u32 %v553, 4294901760
    %555 = vmatpush1.msra.mxu0 %v554
    %v556 = vsub.f32 %v305, %v305
    %v557 = vand.u32 %v556, 4294901760
    %v558 = vsub.f32 %v556, %v557
    %v559 = vand.u32 %v558, 4294901760
    %560 = vmatprep.subr.mxu0 %v559
    %v561 = vsub.f32 %v304, %v304
    %v562 = vand.u32 %v561, 4294901760
    %v563 = vsub.f32 %v561, %v562
    %v564 = vand.u32 %v563, 4294901760
    %565 = vmatpush1.msra.mxu0 %v564
    %v566 = vsub.f32 %v308, %v308
    %v567 = vand.u32 %v566, 4294901760
    %v568 = vsub.f32 %v566, %v567
    %v569 = vand.u32 %v568, 4294901760
    %570 = vmatprep.subr.mxu0 %v569
    %v571 = vsub.f32 %v307, %v307
    %v572 = vand.u32 %v571, 4294901760
    %v573 = vsub.f32 %v571, %v572
    %v574 = vand.u32 %v573, 4294901760
    %575 = vmatpush1.msra.mxu0 %v574
    %v576 = vsub.f32 %v311, %v311
    %v577 = vand.u32 %v576, 4294901760
    %v578 = vsub.f32 %v576, %v577
    %v579 = vand.u32 %v578, 4294901760
    %580 = vmatprep.subr.mxu0 %v579
    %v581 = vsub.f32 %v310, %v310
    %v582 = vand.u32 %v581, 4294901760
    %v583 = vsub.f32 %v581, %v582
    %v584 = vand.u32 %v583, 4294901760
    %585 = vmatpush1.msra.mxu0 %v584
    %586 = vmatprep.subr.mxu0 0.0
    %587 = vmatpush1.msra.mxu0 0.0
    %588 = vmatprep.subr.mxu0 0.0
    %589 = vmatpush1.msra.mxu0 0.0
    %590 = vmatprep.subr.mxu0 0.0
    %591 = vmatpush1.msra.mxu0 0.0
    %592 = vmatprep.subr.mxu0 0.0
    %593 = vmatpush1.msra.mxu0 0.0
    %594 = vmatprep.subr.mxu0 0.0
    %595 = vmatpush1.msra.mxu0 0.0
    %596 = vmatprep.subr.mxu0 0.0
    %597 = vmatpush1.msra.mxu0 0.0
    %598 = vmatprep.subr.mxu0 0.0
    %599 = vmatpush1.msra.mxu0 0.0
    %600 = vmatprep.subr.mxu0 0.0
    %601 = vmatpush1.msra.mxu0 0.0
    %602 = vmatprep.subr.mxu0 0.0
    %603 = vmatpush1.msra.mxu0 0.0
    %604 = vmatprep.subr.mxu0 0.0
    %605 = vmatpush1.msra.mxu0 0.0
    %606 = vmatprep.subr.mxu0 0.0
    %607 = vmatpush1.msra.mxu0 0.0
    %608 = vmatprep.subr.mxu0 0.0
    %609 = vmatpush1.msra.mxu0 0.0
    %610 = vmatprep.subr.mxu0 0.0
    %611 = vmatpush1.msra.mxu0 0.0
    %612 = vmatprep.subr.mxu0 0.0
    %613 = vmatpush1.msra.mxu0 0.0
    %614 = vmatprep.subr.mxu0 0.0
    %615 = vmatpush1.msra.mxu0 0.0
    %616 = vmatprep.subr.mxu0 0.0
    %617 = vmatpush1.msra.mxu0 0.0
    %618 = vmatprep.mubr.f32.mxu0 0.0
    %v619 = vand.u32 %v349, 4294901760
    %620 = vmatmul.mubr.f32.gmra.mrb[0].mxu0 %v619
    %v621 = vpop.f32.mrb[0].mxu0
    %v622 = vadd.f32 %v422, %v621
    %v623 = vpop.f32.mrb[0].mxu0
    %v624 = vadd.f32 %v424, %v623
    %625 = vdwg.mxu0
    %v626 = vsub.f32 %v266, %v266
    %627 = vmatprep.subr.mxu0 %v626
    %v628 = vsub.f32 %v265, %v265
    %629 = vmatpush1.msra.mxu0 %v628
    %v630 = vsub.f32 %v269, %v269
    %631 = vmatprep.subr.mxu0 %v630
    %v632 = vsub.f32 %v268, %v268
    %633 = vmatpush1.msra.mxu0 %v632
    %v634 = vsub.f32 %v272, %v272
    %635 = vmatprep.subr.mxu0 %v634
    %v636 = vsub.f32 %v271, %v271
    %637 = vmatpush1.msra.mxu0 %v636
    %v638 = vsub.f32 %v275, %v275
    %639 = vmatprep.subr.mxu0 %v638
    %v640 = vsub.f32 %v274, %v274
    %641 = vmatpush1.msra.mxu0 %v640
    %v642 = vsub.f32 %v278, %v278
    %643 = vmatprep.subr.mxu0 %v642
    %v644 = vsub.f32 %v277, %v277
    %645 = vmatpush1.msra.mxu0 %v644
    %v646 = vsub.f32 %v281, %v281
    %647 = vmatprep.subr.mxu0 %v646
    %v648 = vsub.f32 %v280, %v280
    %649 = vmatpush1.msra.mxu0 %v648
    %v650 = vsub.f32 %v284, %v284
    %651 = vmatprep.subr.mxu0 %v650
    %v652 = vsub.f32 %v283, %v283
    %653 = vmatpush1.msra.mxu0 %v652
    %v654 = vsub.f32 %v287, %v287
    %655 = vmatprep.subr.mxu0 %v654
    %v656 = vsub.f32 %v286, %v286
    %657 = vmatpush1.msra.mxu0 %v656
    %v658 = vsub.f32 %v290, %v290
    %659 = vmatprep.subr.mxu0 %v658
    %v660 = vsub.f32 %v289, %v289
    %661 = vmatpush1.msra.mxu0 %v660
    %v662 = vsub.f32 %v293, %v293
    %663 = vmatprep.subr.mxu0 %v662
    %v664 = vsub.f32 %v292, %v292
    %665 = vmatpush1.msra.mxu0 %v664
    %v666 = vsub.f32 %v296, %v296
    %667 = vmatprep.subr.mxu0 %v666
    %v668 = vsub.f32 %v295, %v295
    %669 = vmatpush1.msra.mxu0 %v668
    %v670 = vsub.f32 %v299, %v299
    %671 = vmatprep.subr.mxu0 %v670
    %v672 = vsub.f32 %v298, %v298
    %673 = vmatpush1.msra.mxu0 %v672
    %v674 = vsub.f32 %v302, %v302
    %675 = vmatprep.subr.mxu0 %v674
    %v676 = vsub.f32 %v301, %v301
    %677 = vmatpush1.msra.mxu0 %v676
    %v678 = vsub.f32 %v305, %v305
    %679 = vmatprep.subr.mxu0 %v678
    %v680 = vsub.f32 %v304, %v304
    %681 = vmatpush1.msra.mxu0 %v680
    %v682 = vsub.f32 %v308, %v308
    %683 = vmatprep.subr.mxu0 %v682
    %v684 = vsub.f32 %v307, %v307
    %685 = vmatpush1.msra.mxu0 %v684
    %v686 = vsub.f32 %v311, %v311
    %687 = vmatprep.subr.mxu0 %v686
    %v688 = vsub.f32 %v310, %v310
    %689 = vmatpush1.msra.mxu0 %v688
    %690 = vmatprep.subr.mxu0 0.0
    %691 = vmatpush1.msra.mxu0 0.0
    %692 = vmatprep.subr.mxu0 0.0
    %693 = vmatpush1.msra.mxu0 0.0
    %694 = vmatprep.subr.mxu0 0.0
    %695 = vmatpush1.msra.mxu0 0.0
    %696 = vmatprep.subr.mxu0 0.0
    %697 = vmatpush1.msra.mxu0 0.0
    %698 = vmatprep.subr.mxu0 0.0
    %699 = vmatpush1.msra.mxu0 0.0
    %700 = vmatprep.subr.mxu0 0.0
    %701 = vmatpush1.msra.mxu0 0.0
    %702 = vmatprep.subr.mxu0 0.0
    %703 = vmatpush1.msra.mxu0 0.0
    %704 = vmatprep.subr.mxu0 0.0
    %705 = vmatpush1.msra.mxu0 0.0
    %706 = vmatprep.subr.mxu0 0.0
    %707 = vmatpush1.msra.mxu0 0.0
    %708 = vmatprep.subr.mxu0 0.0
    %709 = vmatpush1.msra.mxu0 0.0
    %710 = vmatprep.subr.mxu0 0.0
    %711 = vmatpush1.msra.mxu0 0.0
    %712 = vmatprep.subr.mxu0 0.0
    %713 = vmatpush1.msra.mxu0 0.0
    %714 = vmatprep.subr.mxu0 0.0
    %715 = vmatpush1.msra.mxu0 0.0
    %716 = vmatprep.subr.mxu0 0.0
    %717 = vmatpush1.msra.mxu0 0.0
    %718 = vmatprep.subr.mxu0 0.0
    %719 = vmatpush1.msra.mxu0 0.0
    %720 = vmatprep.subr.mxu0 0.0
    %721 = vmatpush1.msra.mxu0 0.0
    %722 = vmatprep.mubr.f32.mxu0 0.0
    %v723 = vand.u32 %v349, 4294901760
    %v724 = vsub.f32 %v349, %v723
    %725 = vmatmul.mubr.f32.gmra.mrb[0].mxu0 %v724
    %v726 = vpop.f32.mrb[0].mxu0
    %v727 = vadd.f32 %v622, %v726
    %v728 = vpop.f32.mrb[0].mxu0
    %v729 = vadd.f32 %v624, %v728
    %730 = vdwg.mxu0
    %731 = vmatprep.subr.mxu0 %v266
    %732 = vmatpush1.msra.mxu0 %v265
    %733 = vmatprep.subr.mxu0 %v269
    %734 = vmatpush1.msra.mxu0 %v268
    %735 = vmatprep.subr.mxu0 %v272
    %736 = vmatpush1.msra.mxu0 %v271
    %737 = vmatprep.subr.mxu0 %v275
    %738 = vmatpush1.msra.mxu0 %v274
    %739 = vmatprep.subr.mxu0 %v278
    %740 = vmatpush1.msra.mxu0 %v277
    %741 = vmatprep.subr.mxu0 %v281
    %742 = vmatpush1.msra.mxu0 %v280
    %743 = vmatprep.subr.mxu0 %v284
    %744 = vmatpush1.msra.mxu0 %v283
    %745 = vmatprep.subr.mxu0 %v287
    %746 = vmatpush1.msra.mxu0 %v286
    %747 = vmatprep.subr.mxu0 %v290
    %748 = vmatpush1.msra.mxu0 %v289
    %749 = vmatprep.subr.mxu0 %v293
    %750 = vmatpush1.msra.mxu0 %v292
    %751 = vmatprep.subr.mxu0 %v296
    %752 = vmatpush1.msra.mxu0 %v295
    %753 = vmatprep.subr.mxu0 %v299
    %754 = vmatpush1.msra.mxu0 %v298
    %755 = vmatprep.subr.mxu0 %v302
    %756 = vmatpush1.msra.mxu0 %v301
    %757 = vmatprep.subr.mxu0 %v305
    %758 = vmatpush1.msra.mxu0 %v304
    %759 = vmatprep.subr.mxu0 %v308
    %760 = vmatpush1.msra.mxu0 %v307
    %761 = vmatprep.subr.mxu0 %v311
    %762 = vmatpush1.msra.mxu0 %v310
    %763 = vmatprep.subr.mxu0 0.0
    %764 = vmatpush1.msra.mxu0 0.0
    %765 = vmatprep.subr.mxu0 0.0
    %766 = vmatpush1.msra.mxu0 0.0
    %767 = vmatprep.subr.mxu0 0.0
    %768 = vmatpush1.msra.mxu0 0.0
    %769 = vmatprep.subr.mxu0 0.0
    %770 = vmatpush1.msra.mxu0 0.0
    %771 = vmatprep.subr.mxu0 0.0
    %772 = vmatpush1.msra.mxu0 0.0
    %773 = vmatprep.subr.mxu0 0.0
    %774 = vmatpush1.msra.mxu0 0.0
    %775 = vmatprep.subr.mxu0 0.0
    %776 = vmatpush1.msra.mxu0 0.0
    %777 = vmatprep.subr.mxu0 0.0
    %778 = vmatpush1.msra.mxu0 0.0
    %779 = vmatprep.subr.mxu0 0.0
    %780 = vmatpush1.msra.mxu0 0.0
    %781 = vmatprep.subr.mxu0 0.0
    %782 = vmatpush1.msra.mxu0 0.0
    %783 = vmatprep.subr.mxu0 0.0
    %784 = vmatpush1.msra.mxu0 0.0
    %785 = vmatprep.subr.mxu0 0.0
    %786 = vmatpush1.msra.mxu0 0.0
    %787 = vmatprep.subr.mxu0 0.0
    %788 = vmatpush1.msra.mxu0 0.0
    %789 = vmatprep.subr.mxu0 0.0
    %790 = vmatpush1.msra.mxu0 0.0
    %791 = vmatprep.subr.mxu0 0.0
    %792 = vmatpush1.msra.mxu0 0.0
    %793 = vmatprep.subr.mxu0 0.0
    %794 = vmatpush1.msra.mxu0 0.0
    %795 = vmatprep.mubr.f32.mxu0 0.0
    %v796 = vand.u32 %v349, 4294901760
    %v797 = vsub.f32 %v349, %v796
    %v798 = vand.u32 %v797, 4294901760
    %799 = vmatmul.mubr.f32.gmra.mrb[0].mxu0 %v798
    %v800 = vpop.f32.mrb[0].mxu0
    %v801 = vadd.f32 %v727, %v800
    %v802 = vpop.f32.mrb[0].mxu0
    %v803 = vadd.f32 %v729, %v802
    %804 = vdwg.mxu0
    %v805 = vsub.f32 %v266, %v266
    %v806 = vand.u32 %v805, 4294901760
    %807 = vmatprep.subr.mxu0 %v806
    %v808 = vsub.f32 %v265, %v265
    %v809 = vand.u32 %v808, 4294901760
    %810 = vmatpush1.msra.mxu0 %v809
    %v811 = vsub.f32 %v269, %v269
    %v812 = vand.u32 %v811, 4294901760
    %813 = vmatprep.subr.mxu0 %v812
    %v814 = vsub.f32 %v268, %v268
    %v815 = vand.u32 %v814, 4294901760
    %816 = vmatpush1.msra.mxu0 %v815
    %v817 = vsub.f32 %v272, %v272
    %v818 = vand.u32 %v817, 4294901760
    %819 = vmatprep.subr.mxu0 %v818
    %v820 = vsub.f32 %v271, %v271
    %v821 = vand.u32 %v820, 4294901760
    %822 = vmatpush1.msra.mxu0 %v821
    %v823 = vsub.f32 %v275, %v275
    %v824 = vand.u32 %v823, 4294901760
    %825 = vmatprep.subr.mxu0 %v824
    %v826 = vsub.f32 %v274, %v274
    %v827 = vand.u32 %v826, 4294901760
    %828 = vmatpush1.msra.mxu0 %v827
    %v829 = vsub.f32 %v278, %v278
    %v830 = vand.u32 %v829, 4294901760
    %831 = vmatprep.subr.mxu0 %v830
    %v832 = vsub.f32 %v277, %v277
    %v833 = vand.u32 %v832, 4294901760
    %834 = vmatpush1.msra.mxu0 %v833
    %v835 = vsub.f32 %v281, %v281
    %v836 = vand.u32 %v835, 4294901760
    %837 = vmatprep.subr.mxu0 %v836
    %v838 = vsub.f32 %v280, %v280
    %v839 = vand.u32 %v838, 4294901760
    %840 = vmatpush1.msra.mxu0 %v839
    %v841 = vsub.f32 %v284, %v284
    %v842 = vand.u32 %v841, 4294901760
    %843 = vmatprep.subr.mxu0 %v842
    %v844 = vsub.f32 %v283, %v283
    %v845 = vand.u32 %v844, 4294901760
    %846 = vmatpush1.msra.mxu0 %v845
    %v847 = vsub.f32 %v287, %v287
    %v848 = vand.u32 %v847, 4294901760
    %849 = vmatprep.subr.mxu0 %v848
    %v850 = vsub.f32 %v286, %v286
    %v851 = vand.u32 %v850, 4294901760
    %852 = vmatpush1.msra.mxu0 %v851
    %v853 = vsub.f32 %v290, %v290
    %v854 = vand.u32 %v853, 4294901760
    %855 = vmatprep.subr.mxu0 %v854
    %v856 = vsub.f32 %v289, %v289
    %v857 = vand.u32 %v856, 4294901760
    %858 = vmatpush1.msra.mxu0 %v857
    %v859 = vsub.f32 %v293, %v293
    %v860 = vand.u32 %v859, 4294901760
    %861 = vmatprep.subr.mxu0 %v860
    %v862 = vsub.f32 %v292, %v292
    %v863 = vand.u32 %v862, 4294901760
    %864 = vmatpush1.msra.mxu0 %v863
    %v865 = vsub.f32 %v296, %v296
    %v866 = vand.u32 %v865, 4294901760
    %867 = vmatprep.subr.mxu0 %v866
    %v868 = vsub.f32 %v295, %v295
    %v869 = vand.u32 %v868, 4294901760
    %870 = vmatpush1.msra.mxu0 %v869
    %v871 = vsub.f32 %v299, %v299
    %v872 = vand.u32 %v871, 4294901760
    %873 = vmatprep.subr.mxu0 %v872
    %v874 = vsub.f32 %v298, %v298
    %v875 = vand.u32 %v874, 4294901760
    %876 = vmatpush1.msra.mxu0 %v875
    %v877 = vsub.f32 %v302, %v302
    %v878 = vand.u32 %v877, 4294901760
    %879 = vmatprep.subr.mxu0 %v878
    %v880 = vsub.f32 %v301, %v301
    %v881 = vand.u32 %v880, 4294901760
    %882 = vmatpush1.msra.mxu0 %v881
    %v883 = vsub.f32 %v305, %v305
    %v884 = vand.u32 %v883, 4294901760
    %885 = vmatprep.subr.mxu0 %v884
    %v886 = vsub.f32 %v304, %v304
    %v887 = vand.u32 %v886, 4294901760
    %888 = vmatpush1.msra.mxu0 %v887
    %v889 = vsub.f32 %v308, %v308
    %v890 = vand.u32 %v889, 4294901760
    %891 = vmatprep.subr.mxu0 %v890
    %v892 = vsub.f32 %v307, %v307
    %v893 = vand.u32 %v892, 4294901760
    %894 = vmatpush1.msra.mxu0 %v893
    %v895 = vsub.f32 %v311, %v311
    %v896 = vand.u32 %v895, 4294901760
    %897 = vmatprep.subr.mxu0 %v896
    %v898 = vsub.f32 %v310, %v310
    %v899 = vand.u32 %v898, 4294901760
    %900 = vmatpush1.msra.mxu0 %v899
    %901 = vmatprep.subr.mxu0 0.0
    %902 = vmatpush1.msra.mxu0 0.0
    %903 = vmatprep.subr.mxu0 0.0
    %904 = vmatpush1.msra.mxu0 0.0
    %905 = vmatprep.subr.mxu0 0.0
    %906 = vmatpush1.msra.mxu0 0.0
    %907 = vmatprep.subr.mxu0 0.0
    %908 = vmatpush1.msra.mxu0 0.0
    %909 = vmatprep.subr.mxu0 0.0
    %910 = vmatpush1.msra.mxu0 0.0
    %911 = vmatprep.subr.mxu0 0.0
    %912 = vmatpush1.msra.mxu0 0.0
    %913 = vmatprep.subr.mxu0 0.0
    %914 = vmatpush1.msra.mxu0 0.0
    %915 = vmatprep.subr.mxu0 0.0
    %916 = vmatpush1.msra.mxu0 0.0
    %917 = vmatprep.subr.mxu0 0.0
    %918 = vmatpush1.msra.mxu0 0.0
    %919 = vmatprep.subr.mxu0 0.0
    %920 = vmatpush1.msra.mxu0 0.0
    %921 = vmatprep.subr.mxu0 0.0
    %922 = vmatpush1.msra.mxu0 0.0
    %923 = vmatprep.subr.mxu0 0.0
    %924 = vmatpush1.msra.mxu0 0.0
    %925 = vmatprep.subr.mxu0 0.0
    %926 = vmatpush1.msra.mxu0 0.0
    %927 = vmatprep.subr.mxu0 0.0
    %928 = vmatpush1.msra.mxu0 0.0
    %929 = vmatprep.subr.mxu0 0.0
    %930 = vmatpush1.msra.mxu0 0.0
    %931 = vmatprep.subr.mxu0 0.0
    %932 = vmatpush1.msra.mxu0 0.0
    %933 = vmatprep.mubr.f32.mxu0 0.0
    %v934 = vand.u32 %v349, 4294901760
    %935 = vmatmul.mubr.f32.gmra.mrb[0].mxu0 %v934
    %v936 = vpop.f32.mrb[0].mxu0
    %v937 = vadd.f32 %v801, %v936
    %v938 = vpop.f32.mrb[0].mxu0
    %v939 = vadd.f32 %v803, %v938
    %940 = vdwg.mxu0
    %941 = vmatprep.subr.mxu0 %v266
    %942 = vmatpush1.msra.mxu0 %v265
    %943 = vmatprep.subr.mxu0 %v269
    %944 = vmatpush1.msra.mxu0 %v268
    %945 = vmatprep.subr.mxu0 %v272
    %946 = vmatpush1.msra.mxu0 %v271
    %947 = vmatprep.subr.mxu0 %v275
    %948 = vmatpush1.msra.mxu0 %v274
    %949 = vmatprep.subr.mxu0 %v278
    %950 = vmatpush1.msra.mxu0 %v277
    %951 = vmatprep.subr.mxu0 %v281
    %952 = vmatpush1.msra.mxu0 %v280
    %953 = vmatprep.subr.mxu0 %v284
    %954 = vmatpush1.msra.mxu0 %v283
    %955 = vmatprep.subr.mxu0 %v287
    %956 = vmatpush1.msra.mxu0 %v286
    %957 = vmatprep.subr.mxu0 %v290
    %958 = vmatpush1.msra.mxu0 %v289
    %959 = vmatprep.subr.mxu0 %v293
    %960 = vmatpush1.msra.mxu0 %v292
    %961 = vmatprep.subr.mxu0 %v296
    %962 = vmatpush1.msra.mxu0 %v295
    %963 = vmatprep.subr.mxu0 %v299
    %964 = vmatpush1.msra.mxu0 %v298
    %965 = vmatprep.subr.mxu0 %v302
    %966 = vmatpush1.msra.mxu0 %v301
    %967 = vmatprep.subr.mxu0 %v305
    %968 = vmatpush1.msra.mxu0 %v304
    %969 = vmatprep.subr.mxu0 %v308
    %970 = vmatpush1.msra.mxu0 %v307
    %971 = vmatprep.subr.mxu0 %v311
    %972 = vmatpush1.msra.mxu0 %v310
    %973 = vmatprep.subr.mxu0 0.0
    %974 = vmatpush1.msra.mxu0 0.0
    %975 = vmatprep.subr.mxu0 0.0
    %976 = vmatpush1.msra.mxu0 0.0
    %977 = vmatprep.subr.mxu0 0.0
    %978 = vmatpush1.msra.mxu0 0.0
    %979 = vmatprep.subr.mxu0 0.0
    %980 = vmatpush1.msra.mxu0 0.0
    %981 = vmatprep.subr.mxu0 0.0
    %982 = vmatpush1.msra.mxu0 0.0
    %983 = vmatprep.subr.mxu0 0.0
    %984 = vmatpush1.msra.mxu0 0.0
    %985 = vmatprep.subr.mxu0 0.0
    %986 = vmatpush1.msra.mxu0 0.0
    %987 = vmatprep.subr.mxu0 0.0
    %988 = vmatpush1.msra.mxu0 0.0
    %989 = vmatprep.subr.mxu0 0.0
    %990 = vmatpush1.msra.mxu0 0.0
    %991 = vmatprep.subr.mxu0 0.0
    %992 = vmatpush1.msra.mxu0 0.0
    %993 = vmatprep.subr.mxu0 0.0
    %994 = vmatpush1.msra.mxu0 0.0
    %995 = vmatprep.subr.mxu0 0.0
    %996 = vmatpush1.msra.mxu0 0.0
    %997 = vmatprep.subr.mxu0 0.0
    %998 = vmatpush1.msra.mxu0 0.0
    %999 = vmatprep.subr.mxu0 0.0
    %1000 = vmatpush1.msra.mxu0 0.0
    %1001 = vmatprep.subr.mxu0 0.0
    %1002 = vmatpush1.msra.mxu0 0.0
    %1003 = vmatprep.subr.mxu0 0.0
    %1004 = vmatpush1.msra.mxu0 0.0
    %1005 = vmatprep.mubr.f32.mxu0 0.0
    %v1006 = vand.u32 %v349, 4294901760
    %1007 = vmatmul.mubr.f32.gmra.mrb[0].mxu0 %v1006
    %v1008 = vpop.f32.mrb[0].mxu0
    %v1009 = vadd.f32 %v937, %v1008
    %v1010 = vpop.f32.mrb[0].mxu0
    %v1011 = vadd.f32 %v939, %v1010
    %1012 = vdwg.mxu0
    %1013 = vmatprep.subr.mxu0 0.0
    %1014 = vmatpush1.msra.mxu0 %v267
    %1015 = vmatprep.subr.mxu0 0.0
    %1016 = vmatpush1.msra.mxu0 %v270
    %1017 = vmatprep.subr.mxu0 0.0
    %1018 = vmatpush1.msra.mxu0 %v273
    %1019 = vmatprep.subr.mxu0 0.0
    %1020 = vmatpush1.msra.mxu0 %v276
    %1021 = vmatprep.subr.mxu0 0.0
    %1022 = vmatpush1.msra.mxu0 %v279
    %1023 = vmatprep.subr.mxu0 0.0
    %1024 = vmatpush1.msra.mxu0 %v282
    %1025 = vmatprep.subr.mxu0 0.0
    %1026 = vmatpush1.msra.mxu0 %v285
    %1027 = vmatprep.subr.mxu0 0.0
    %1028 = vmatpush1.msra.mxu0 %v288
    %1029 = vmatprep.subr.mxu0 0.0
    %1030 = vmatpush1.msra.mxu0 %v291
    %1031 = vmatprep.subr.mxu0 0.0
    %1032 = vmatpush1.msra.mxu0 %v294
    %1033 = vmatprep.subr.mxu0 0.0
    %1034 = vmatpush1.msra.mxu0 %v297
    %1035 = vmatprep.subr.mxu0 0.0
    %1036 = vmatpush1.msra.mxu0 %v300
    %1037 = vmatprep.subr.mxu0 0.0
    %1038 = vmatpush1.msra.mxu0 %v303
    %1039 = vmatprep.subr.mxu0 0.0
    %1040 = vmatpush1.msra.mxu0 %v306
    %1041 = vmatprep.subr.mxu0 0.0
    %1042 = vmatpush1.msra.mxu0 %v309
    %1043 = vmatprep.subr.mxu0 0.0
    %1044 = vmatpush1.msra.mxu0 %v312
    %1045 = vmatprep.subr.mxu0 0.0
    %1046 = vmatpush1.msra.mxu0 0.0
    %1047 = vmatprep.subr.mxu0 0.0
    %1048 = vmatpush1.msra.mxu0 0.0
    %1049 = vmatprep.subr.mxu0 0.0
    %1050 = vmatpush1.msra.mxu0 0.0
    %1051 = vmatprep.subr.mxu0 0.0
    %1052 = vmatpush1.msra.mxu0 0.0
    %1053 = vmatprep.subr.mxu0 0.0
    %1054 = vmatpush1.msra.mxu0 0.0
    %1055 = vmatprep.subr.mxu0 0.0
    %1056 = vmatpush1.msra.mxu0 0.0
    %1057 = vmatprep.subr.mxu0 0.0
    %1058 = vmatpush1.msra.mxu0 0.0
    %1059 = vmatprep.subr.mxu0 0.0
    %1060 = vmatpush1.msra.mxu0 0.0
    %1061 = vmatprep.subr.mxu0 0.0
    %1062 = vmatpush1.msra.mxu0 0.0
    %1063 = vmatprep.subr.mxu0 0.0
    %1064 = vmatpush1.msra.mxu0 0.0
    %1065 = vmatprep.subr.mxu0 0.0
    %1066 = vmatpush1.msra.mxu0 0.0
    %1067 = vmatprep.subr.mxu0 0.0
    %1068 = vmatpush1.msra.mxu0 0.0
    %1069 = vmatprep.subr.mxu0 0.0
    %1070 = vmatpush1.msra.mxu0 0.0
    %1071 = vmatprep.subr.mxu0 0.0
    %1072 = vmatpush1.msra.mxu0 0.0
    %1073 = vmatprep.subr.mxu0 0.0
    %1074 = vmatpush1.msra.mxu0 0.0
    %1075 = vmatprep.subr.mxu0 0.0
    %1076 = vmatpush1.msra.mxu0 0.0
    %1077 = vmatprep.mubr.f32.mxu0 0.0
    %v1078 = vand.u32 %v349, 4294901760
    %v1079 = vsub.f32 %v349, %v1078
    %v1080 = vand.u32 %v1079, 4294901760
    %v1081 = vsub.f32 %v1079, %v1080
    %v1082 = vand.u32 %v1081, 4294901760
    %1083 = vmatmul.mubr.f32.gmra.mrb[0].mxu0 %v1082
    %v1084 = vpop.f32.mrb[0].mxu0
    %v1085 = vadd.f32 0.0, %v1084
    %v1086 = vpop.f32.mrb[0].mxu0
    %1087 = vdwg.mxu0
    %1088 = vmatprep.subr.mxu0 0.0
    %v1089 = vsub.f32 %v267, %v267
    %v1090 = vand.u32 %v1089, 4294901760
    %v1091 = vsub.f32 %v1089, %v1090
    %v1092 = vand.u32 %v1091, 4294901760
    %1093 = vmatpush1.msra.mxu0 %v1092
    %1094 = vmatprep.subr.mxu0 0.0
    %v1095 = vsub.f32 %v270, %v270
    %v1096 = vand.u32 %v1095, 4294901760
    %v1097 = vsub.f32 %v1095, %v1096
    %v1098 = vand.u32 %v1097, 4294901760
    %1099 = vmatpush1.msra.mxu0 %v1098
    %1100 = vmatprep.subr.mxu0 0.0
    %v1101 = vsub.f32 %v273, %v273
    %v1102 = vand.u32 %v1101, 4294901760
    %v1103 = vsub.f32 %v1101, %v1102
    %v1104 = vand.u32 %v1103, 4294901760
    %1105 = vmatpush1.msra.mxu0 %v1104
    %1106 = vmatprep.subr.mxu0 0.0
    %v1107 = vsub.f32 %v276, %v276
    %v1108 = vand.u32 %v1107, 4294901760
    %v1109 = vsub.f32 %v1107, %v1108
    %v1110 = vand.u32 %v1109, 4294901760
    %1111 = vmatpush1.msra.mxu0 %v1110
    %1112 = vmatprep.subr.mxu0 0.0
    %v1113 = vsub.f32 %v279, %v279
    %v1114 = vand.u32 %v1113, 4294901760
    %v1115 = vsub.f32 %v1113, %v1114
    %v1116 = vand.u32 %v1115, 4294901760
    %1117 = vmatpush1.msra.mxu0 %v1116
    %1118 = vmatprep.subr.mxu0 0.0
    %v1119 = vsub.f32 %v282, %v282
    %v1120 = vand.u32 %v1119, 4294901760
    %v1121 = vsub.f32 %v1119, %v1120
    %v1122 = vand.u32 %v1121, 4294901760
    %1123 = vmatpush1.msra.mxu0 %v1122
    %1124 = vmatprep.subr.mxu0 0.0
    %v1125 = vsub.f32 %v285, %v285
    %v1126 = vand.u32 %v1125, 4294901760
    %v1127 = vsub.f32 %v1125, %v1126
    %v1128 = vand.u32 %v1127, 4294901760
    %1129 = vmatpush1.msra.mxu0 %v1128
    %1130 = vmatprep.subr.mxu0 0.0
    %v1131 = vsub.f32 %v288, %v288
    %v1132 = vand.u32 %v1131, 4294901760
    %v1133 = vsub.f32 %v1131, %v1132
    %v1134 = vand.u32 %v1133, 4294901760
    %1135 = vmatpush1.msra.mxu0 %v1134
    %1136 = vmatprep.subr.mxu0 0.0
    %v1137 = vsub.f32 %v291, %v291
    %v1138 = vand.u32 %v1137, 4294901760
    %v1139 = vsub.f32 %v1137, %v1138
    %v1140 = vand.u32 %v1139, 4294901760
    %1141 = vmatpush1.msra.mxu0 %v1140
    %1142 = vmatprep.subr.mxu0 0.0
    %v1143 = vsub.f32 %v294, %v294
    %v1144 = vand.u32 %v1143, 4294901760
    %v1145 = vsub.f32 %v1143, %v1144
    %v1146 = vand.u32 %v1145, 4294901760
    %1147 = vmatpush1.msra.mxu0 %v1146
    %1148 = vmatprep.subr.mxu0 0.0
    %v1149 = vsub.f32 %v297, %v297
    %v1150 = vand.u32 %v1149, 4294901760
    %v1151 = vsub.f32 %v1149, %v1150
    %v1152 = vand.u32 %v1151, 4294901760
    %1153 = vmatpush1.msra.mxu0 %v1152
    %1154 = vmatprep.subr.mxu0 0.0
    %v1155 = vsub.f32 %v300, %v300
    %v1156 = vand.u32 %v1155, 4294901760
    %v1157 = vsub.f32 %v1155, %v1156
    %v1158 = vand.u32 %v1157, 4294901760
    %1159 = vmatpush1.msra.mxu0 %v1158
    %1160 = vmatprep.subr.mxu0 0.0
    %v1161 = vsub.f32 %v303, %v303
    %v1162 = vand.u32 %v1161, 4294901760
    %v1163 = vsub.f32 %v1161, %v1162
    %v1164 = vand.u32 %v1163, 4294901760
    %1165 = vmatpush1.msra.mxu0 %v1164
    %1166 = vmatprep.subr.mxu0 0.0
    %v1167 = vsub.f32 %v306, %v306
    %v1168 = vand.u32 %v1167, 4294901760
    %v1169 = vsub.f32 %v1167, %v1168
    %v1170 = vand.u32 %v1169, 4294901760
    %1171 = vmatpush1.msra.mxu0 %v1170
    %1172 = vmatprep.subr.mxu0 0.0
    %v1173 = vsub.f32 %v309, %v309
    %v1174 = vand.u32 %v1173, 4294901760
    %v1175 = vsub.f32 %v1173, %v1174
    %v1176 = vand.u32 %v1175, 4294901760
    %1177 = vmatpush1.msra.mxu0 %v1176
    %1178 = vmatprep.subr.mxu0 0.0
    %v1179 = vsub.f32 %v312, %v312
    %v1180 = vand.u32 %v1179, 4294901760
    %v1181 = vsub.f32 %v1179, %v1180
    %v1182 = vand.u32 %v1181, 4294901760
    %1183 = vmatpush1.msra.mxu0 %v1182
    %1184 = vmatprep.subr.mxu0 0.0
    %1185 = vmatpush1.msra.mxu0 0.0
    %1186 = vmatprep.subr.mxu0 0.0
    %1187 = vmatpush1.msra.mxu0 0.0
    %1188 = vmatprep.subr.mxu0 0.0
    %1189 = vmatpush1.msra.mxu0 0.0
    %1190 = vmatprep.subr.mxu0 0.0
    %1191 = vmatpush1.msra.mxu0 0.0
    %1192 = vmatprep.subr.mxu0 0.0
    %1193 = vmatpush1.msra.mxu0 0.0
    %1194 = vmatprep.subr.mxu0 0.0
    %1195 = vmatpush1.msra.mxu0 0.0
    %1196 = vmatprep.subr.mxu0 0.0
    %1197 = vmatpush1.msra.mxu0 0.0
    %1198 = vmatprep.subr.mxu0 0.0
    %1199 = vmatpush1.msra.mxu0 0.0
    %1200 = vmatprep.subr.mxu0 0.0
    %1201 = vmatpush1.msra.mxu0 0.0
    %1202 = vmatprep.subr.mxu0 0.0
    %1203 = vmatpush1.msra.mxu0 0.0
    %1204 = vmatprep.subr.mxu0 0.0
    %1205 = vmatpush1.msra.mxu0 0.0
    %1206 = vmatprep.subr.mxu0 0.0
    %1207 = vmatpush1.msra.mxu0 0.0
    %1208 = vmatprep.subr.mxu0 0.0
    %1209 = vmatpush1.msra.mxu0 0.0
    %1210 = vmatprep.subr.mxu0 0.0
    %1211 = vmatpush1.msra.mxu0 0.0
    %1212 = vmatprep.subr.mxu0 0.0
    %1213 = vmatpush1.msra.mxu0 0.0
    %1214 = vmatprep.subr.mxu0 0.0
    %1215 = vmatpush1.msra.mxu0 0.0
    %1216 = vmatprep.mubr.f32.mxu0 0.0
    %v1217 = vand.u32 %v349, 4294901760
    %1218 = vmatmul.mubr.f32.gmra.mrb[0].mxu0 %v1217
    %v1219 = vpop.f32.mrb[0].mxu0
    %v1220 = vadd.f32 %v1085, %v1219
    %v1221 = vpop.f32.mrb[0].mxu0
    %1222 = vdwg.mxu0
    %1223 = vmatprep.subr.mxu0 0.0
    %v1224 = vsub.f32 %v267, %v267
    %1225 = vmatpush1.msra.mxu0 %v1224
    %1226 = vmatprep.subr.mxu0 0.0
    %v1227 = vsub.f32 %v270, %v270
    %1228 = vmatpush1.msra.mxu0 %v1227
    %1229 = vmatprep.subr.mxu0 0.0
    %v1230 = vsub.f32 %v273, %v273
    %1231 = vmatpush1.msra.mxu0 %v1230
    %1232 = vmatprep.subr.mxu0 0.0
    %v1233 = vsub.f32 %v276, %v276
    %1234 = vmatpush1.msra.mxu0 %v1233
    %1235 = vmatprep.subr.mxu0 0.0
    %v1236 = vsub.f32 %v279, %v279
    %1237 = vmatpush1.msra.mxu0 %v1236
    %1238 = vmatprep.subr.mxu0 0.0
    %v1239 = vsub.f32 %v282, %v282
    %1240 = vmatpush1.msra.mxu0 %v1239
    %1241 = vmatprep.subr.mxu0 0.0
    %v1242 = vsub.f32 %v285, %v285
    %1243 = vmatpush1.msra.mxu0 %v1242
    %1244 = vmatprep.subr.mxu0 0.0
    %v1245 = vsub.f32 %v288, %v288
    %1246 = vmatpush1.msra.mxu0 %v1245
    %1247 = vmatprep.subr.mxu0 0.0
    %v1248 = vsub.f32 %v291, %v291
    %1249 = vmatpush1.msra.mxu0 %v1248
    %1250 = vmatprep.subr.mxu0 0.0
    %v1251 = vsub.f32 %v294, %v294
    %1252 = vmatpush1.msra.mxu0 %v1251
    %1253 = vmatprep.subr.mxu0 0.0
    %v1254 = vsub.f32 %v297, %v297
    %1255 = vmatpush1.msra.mxu0 %v1254
    %1256 = vmatprep.subr.mxu0 0.0
    %v1257 = vsub.f32 %v300, %v300
    %1258 = vmatpush1.msra.mxu0 %v1257
    %1259 = vmatprep.subr.mxu0 0.0
    %v1260 = vsub.f32 %v303, %v303
    %1261 = vmatpush1.msra.mxu0 %v1260
    %1262 = vmatprep.subr.mxu0 0.0
    %v1263 = vsub.f32 %v306, %v306
    %1264 = vmatpush1.msra.mxu0 %v1263
    %1265 = vmatprep.subr.mxu0 0.0
    %v1266 = vsub.f32 %v309, %v309
    %1267 = vmatpush1.msra.mxu0 %v1266
    %1268 = vmatprep.subr.mxu0 0.0
    %v1269 = vsub.f32 %v312, %v312
    %1270 = vmatpush1.msra.mxu0 %v1269
    %1271 = vmatprep.subr.mxu0 0.0
    %1272 = vmatpush1.msra.mxu0 0.0
    %1273 = vmatprep.subr.mxu0 0.0
    %1274 = vmatpush1.msra.mxu0 0.0
    %1275 = vmatprep.subr.mxu0 0.0
    %1276 = vmatpush1.msra.mxu0 0.0
    %1277 = vmatprep.subr.mxu0 0.0
    %1278 = vmatpush1.msra.mxu0 0.0
    %1279 = vmatprep.subr.mxu0 0.0
    %1280 = vmatpush1.msra.mxu0 0.0
    %1281 = vmatprep.subr.mxu0 0.0
    %1282 = vmatpush1.msra.mxu0 0.0
    %1283 = vmatprep.subr.mxu0 0.0
    %1284 = vmatpush1.msra.mxu0 0.0
    %1285 = vmatprep.subr.mxu0 0.0
    %1286 = vmatpush1.msra.mxu0 0.0
    %1287 = vmatprep.subr.mxu0 0.0
    %1288 = vmatpush1.msra.mxu0 0.0
    %1289 = vmatprep.subr.mxu0 0.0
    %1290 = vmatpush1.msra.mxu0 0.0
    %1291 = vmatprep.subr.mxu0 0.0
    %1292 = vmatpush1.msra.mxu0 0.0
    %1293 = vmatprep.subr.mxu0 0.0
    %1294 = vmatpush1.msra.mxu0 0.0
    %1295 = vmatprep.subr.mxu0 0.0
    %1296 = vmatpush1.msra.mxu0 0.0
    %1297 = vmatprep.subr.mxu0 0.0
    %1298 = vmatpush1.msra.mxu0 0.0
    %1299 = vmatprep.subr.mxu0 0.0
    %1300 = vmatpush1.msra.mxu0 0.0
    %1301 = vmatprep.subr.mxu0 0.0
    %1302 = vmatpush1.msra.mxu0 0.0
    %1303 = vmatprep.mubr.f32.mxu0 0.0
    %v1304 = vand.u32 %v349, 4294901760
    %v1305 = vsub.f32 %v349, %v1304
    %1306 = vmatmul.mubr.f32.gmra.mrb[0].mxu0 %v1305
    %v1307 = vpop.f32.mrb[0].mxu0
    %v1308 = vadd.f32 %v1220, %v1307
    %v1309 = vpop.f32.mrb[0].mxu0
    %1310 = vdwg.mxu0
    %1311 = vmatprep.subr.mxu0 0.0
    %1312 = vmatpush1.msra.mxu0 %v267
    %1313 = vmatprep.subr.mxu0 0.0
    %1314 = vmatpush1.msra.mxu0 %v270
    %1315 = vmatprep.subr.mxu0 0.0
    %1316 = vmatpush1.msra.mxu0 %v273
    %1317 = vmatprep.subr.mxu0 0.0
    %1318 = vmatpush1.msra.mxu0 %v276
    %1319 = vmatprep.subr.mxu0 0.0
    %1320 = vmatpush1.msra.mxu0 %v279
    %1321 = vmatprep.subr.mxu0 0.0
    %1322 = vmatpush1.msra.mxu0 %v282
    %1323 = vmatprep.subr.mxu0 0.0
    %1324 = vmatpush1.msra.mxu0 %v285
    %1325 = vmatprep.subr.mxu0 0.0
    %1326 = vmatpush1.msra.mxu0 %v288
    %1327 = vmatprep.subr.mxu0 0.0
    %1328 = vmatpush1.msra.mxu0 %v291
    %1329 = vmatprep.subr.mxu0 0.0
    %1330 = vmatpush1.msra.mxu0 %v294
    %1331 = vmatprep.subr.mxu0 0.0
    %1332 = vmatpush1.msra.mxu0 %v297
    %1333 = vmatprep.subr.mxu0 0.0
    %1334 = vmatpush1.msra.mxu0 %v300
    %1335 = vmatprep.subr.mxu0 0.0
    %1336 = vmatpush1.msra.mxu0 %v303
    %1337 = vmatprep.subr.mxu0 0.0
    %1338 = vmatpush1.msra.mxu0 %v306
    %1339 = vmatprep.subr.mxu0 0.0
    %1340 = vmatpush1.msra.mxu0 %v309
    %1341 = vmatprep.subr.mxu0 0.0
    %1342 = vmatpush1.msra.mxu0 %v312
    %1343 = vmatprep.subr.mxu0 0.0
    %1344 = vmatpush1.msra.mxu0 0.0
    %1345 = vmatprep.subr.mxu0 0.0
    %1346 = vmatpush1.msra.mxu0 0.0
    %1347 = vmatprep.subr.mxu0 0.0
    %1348 = vmatpush1.msra.mxu0 0.0
    %1349 = vmatprep.subr.mxu0 0.0
    %1350 = vmatpush1.msra.mxu0 0.0
    %1351 = vmatprep.subr.mxu0 0.0
    %1352 = vmatpush1.msra.mxu0 0.0
    %1353 = vmatprep.subr.mxu0 0.0
    %1354 = vmatpush1.msra.mxu0 0.0
    %1355 = vmatprep.subr.mxu0 0.0
    %1356 = vmatpush1.msra.mxu0 0.0
    %1357 = vmatprep.subr.mxu0 0.0
    %1358 = vmatpush1.msra.mxu0 0.0
    %1359 = vmatprep.subr.mxu0 0.0
    %1360 = vmatpush1.msra.mxu0 0.0
    %1361 = vmatprep.subr.mxu0 0.0
    %1362 = vmatpush1.msra.mxu0 0.0
    %1363 = vmatprep.subr.mxu0 0.0
    %1364 = vmatpush1.msra.mxu0 0.0
    %1365 = vmatprep.subr.mxu0 0.0
    %1366 = vmatpush1.msra.mxu0 0.0
    %1367 = vmatprep.subr.mxu0 0.0
    %1368 = vmatpush1.msra.mxu0 0.0
    %1369 = vmatprep.subr.mxu0 0.0
    %1370 = vmatpush1.msra.mxu0 0.0
    %1371 = vmatprep.subr.mxu0 0.0
    %1372 = vmatpush1.msra.mxu0 0.0
    %1373 = vmatprep.subr.mxu0 0.0
    %1374 = vmatpush1.msra.mxu0 0.0
    %1375 = vmatprep.mubr.f32.mxu0 0.0
    %v1376 = vand.u32 %v349, 4294901760
    %v1377 = vsub.f32 %v349, %v1376
    %v1378 = vand.u32 %v1377, 4294901760
    %1379 = vmatmul.mubr.f32.gmra.mrb[0].mxu0 %v1378
    %v1380 = vpop.f32.mrb[0].mxu0
    %v1381 = vadd.f32 %v1308, %v1380
    %v1382 = vpop.f32.mrb[0].mxu0
    %1383 = vdwg.mxu0
    %1384 = vmatprep.subr.mxu0 0.0
    %v1385 = vsub.f32 %v267, %v267
    %v1386 = vand.u32 %v1385, 4294901760
    %1387 = vmatpush1.msra.mxu0 %v1386
    %1388 = vmatprep.subr.mxu0 0.0
    %v1389 = vsub.f32 %v270, %v270
    %v1390 = vand.u32 %v1389, 4294901760
    %1391 = vmatpush1.msra.mxu0 %v1390
    %1392 = vmatprep.subr.mxu0 0.0
    %v1393 = vsub.f32 %v273, %v273
    %v1394 = vand.u32 %v1393, 4294901760
    %1395 = vmatpush1.msra.mxu0 %v1394
    %1396 = vmatprep.subr.mxu0 0.0
    %v1397 = vsub.f32 %v276, %v276
    %v1398 = vand.u32 %v1397, 4294901760
    %1399 = vmatpush1.msra.mxu0 %v1398
    %1400 = vmatprep.subr.mxu0 0.0
    %v1401 = vsub.f32 %v279, %v279
    %v1402 = vand.u32 %v1401, 4294901760
    %1403 = vmatpush1.msra.mxu0 %v1402
    %1404 = vmatprep.subr.mxu0 0.0
    %v1405 = vsub.f32 %v282, %v282
    %v1406 = vand.u32 %v1405, 4294901760
    %1407 = vmatpush1.msra.mxu0 %v1406
    %1408 = vmatprep.subr.mxu0 0.0
    %v1409 = vsub.f32 %v285, %v285
    %v1410 = vand.u32 %v1409, 4294901760
    %1411 = vmatpush1.msra.mxu0 %v1410
    %1412 = vmatprep.subr.mxu0 0.0
    %v1413 = vsub.f32 %v288, %v288
    %v1414 = vand.u32 %v1413, 4294901760
    %1415 = vmatpush1.msra.mxu0 %v1414
    %1416 = vmatprep.subr.mxu0 0.0
    %v1417 = vsub.f32 %v291, %v291
    %v1418 = vand.u32 %v1417, 4294901760
    %1419 = vmatpush1.msra.mxu0 %v1418
    %1420 = vmatprep.subr.mxu0 0.0
    %v1421 = vsub.f32 %v294, %v294
    %v1422 = vand.u32 %v1421, 4294901760
    %1423 = vmatpush1.msra.mxu0 %v1422
    %1424 = vmatprep.subr.mxu0 0.0
    %v1425 = vsub.f32 %v297, %v297
    %v1426 = vand.u32 %v1425, 4294901760
    %1427 = vmatpush1.msra.mxu0 %v1426
    %1428 = vmatprep.subr.mxu0 0.0
    %v1429 = vsub.f32 %v300, %v300
    %v1430 = vand.u32 %v1429, 4294901760
    %1431 = vmatpush1.msra.mxu0 %v1430
    %1432 = vmatprep.subr.mxu0 0.0
    %v1433 = vsub.f32 %v303, %v303
    %v1434 = vand.u32 %v1433, 4294901760
    %1435 = vmatpush1.msra.mxu0 %v1434
    %1436 = vmatprep.subr.mxu0 0.0
    %v1437 = vsub.f32 %v306, %v306
    %v1438 = vand.u32 %v1437, 4294901760
    %1439 = vmatpush1.msra.mxu0 %v1438
    %1440 = vmatprep.subr.mxu0 0.0
    %v1441 = vsub.f32 %v309, %v309
    %v1442 = vand.u32 %v1441, 4294901760
    %1443 = vmatpush1.msra.mxu0 %v1442
    %1444 = vmatprep.subr.mxu0 0.0
    %v1445 = vsub.f32 %v312, %v312
    %v1446 = vand.u32 %v1445, 4294901760
    %1447 = vmatpush1.msra.mxu0 %v1446
    %1448 = vmatprep.subr.mxu0 0.0
    %1449 = vmatpush1.msra.mxu0 0.0
    %1450 = vmatprep.subr.mxu0 0.0
    %1451 = vmatpush1.msra.mxu0 0.0
    %1452 = vmatprep.subr.mxu0 0.0
    %1453 = vmatpush1.msra.mxu0 0.0
    %1454 = vmatprep.subr.mxu0 0.0
    %1455 = vmatpush1.msra.mxu0 0.0
    %1456 = vmatprep.subr.mxu0 0.0
    %1457 = vmatpush1.msra.mxu0 0.0
    %1458 = vmatprep.subr.mxu0 0.0
    %1459 = vmatpush1.msra.mxu0 0.0
    %1460 = vmatprep.subr.mxu0 0.0
    %1461 = vmatpush1.msra.mxu0 0.0
    %1462 = vmatprep.subr.mxu0 0.0
    %1463 = vmatpush1.msra.mxu0 0.0
    %1464 = vmatprep.subr.mxu0 0.0
    %1465 = vmatpush1.msra.mxu0 0.0
    %1466 = vmatprep.subr.mxu0 0.0
    %1467 = vmatpush1.msra.mxu0 0.0
    %1468 = vmatprep.subr.mxu0 0.0
    %1469 = vmatpush1.msra.mxu0 0.0
    %1470 = vmatprep.subr.mxu0 0.0
    %1471 = vmatpush1.msra.mxu0 0.0
    %1472 = vmatprep.subr.mxu0 0.0
    %1473 = vmatpush1.msra.mxu0 0.0
    %1474 = vmatprep.subr.mxu0 0.0
    %1475 = vmatpush1.msra.mxu0 0.0
    %1476 = vmatprep.subr.mxu0 0.0
    %1477 = vmatpush1.msra.mxu0 0.0
    %1478 = vmatprep.subr.mxu0 0.0
    %1479 = vmatpush1.msra.mxu0 0.0
    %1480 = vmatprep.mubr.f32.mxu0 0.0
    %v1481 = vand.u32 %v349, 4294901760
    %1482 = vmatmul.mubr.f32.gmra.mrb[0].mxu0 %v1481
    %v1483 = vpop.f32.mrb[0].mxu0
    %v1484 = vadd.f32 %v1381, %v1483
    %v1485 = vpop.f32.mrb[0].mxu0
    %1486 = vdwg.mxu0
    %1487 = vmatprep.subr.mxu0 0.0
    %1488 = vmatpush1.msra.mxu0 %v267
    %1489 = vmatprep.subr.mxu0 0.0
    %1490 = vmatpush1.msra.mxu0 %v270
    %1491 = vmatprep.subr.mxu0 0.0
    %1492 = vmatpush1.msra.mxu0 %v273
    %1493 = vmatprep.subr.mxu0 0.0
    %1494 = vmatpush1.msra.mxu0 %v276
    %1495 = vmatprep.subr.mxu0 0.0
    %1496 = vmatpush1.msra.mxu0 %v279
    %1497 = vmatprep.subr.mxu0 0.0
    %1498 = vmatpush1.msra.mxu0 %v282
    %1499 = vmatprep.subr.mxu0 0.0
    %1500 = vmatpush1.msra.mxu0 %v285
    %1501 = vmatprep.subr.mxu0 0.0
    %1502 = vmatpush1.msra.mxu0 %v288
    %1503 = vmatprep.subr.mxu0 0.0
    %1504 = vmatpush1.msra.mxu0 %v291
    %1505 = vmatprep.subr.mxu0 0.0
    %1506 = vmatpush1.msra.mxu0 %v294
    %1507 = vmatprep.subr.mxu0 0.0
    %1508 = vmatpush1.msra.mxu0 %v297
    %1509 = vmatprep.subr.mxu0 0.0
    %1510 = vmatpush1.msra.mxu0 %v300
    %1511 = vmatprep.subr.mxu0 0.0
    %1512 = vmatpush1.msra.mxu0 %v303
    %1513 = vmatprep.subr.mxu0 0.0
    %1514 = vmatpush1.msra.mxu0 %v306
    %1515 = vmatprep.subr.mxu0 0.0
    %1516 = vmatpush1.msra.mxu0 %v309
    %1517 = vmatprep.subr.mxu0 0.0
    %1518 = vmatpush1.msra.mxu0 %v312
    %1519 = vmatprep.subr.mxu0 0.0
    %1520 = vmatpush1.msra.mxu0 0.0
    %1521 = vmatprep.subr.mxu0 0.0
    %1522 = vmatpush1.msra.mxu0 0.0
    %1523 = vmatprep.subr.mxu0 0.0
    %1524 = vmatpush1.msra.mxu0 0.0
    %1525 = vmatprep.subr.mxu0 0.0
    %1526 = vmatpush1.msra.mxu0 0.0
    %1527 = vmatprep.subr.mxu0 0.0
    %1528 = vmatpush1.msra.mxu0 0.0
    %1529 = vmatprep.subr.mxu0 0.0
    %1530 = vmatpush1.msra.mxu0 0.0
    %1531 = vmatprep.subr.mxu0 0.0
    %1532 = vmatpush1.msra.mxu0 0.0
    %1533 = vmatprep.subr.mxu0 0.0
    %1534 = vmatpush1.msra.mxu0 0.0
    %1535 = vmatprep.subr.mxu0 0.0
    %1536 = vmatpush1.msra.mxu0 0.0
    %1537 = vmatprep.subr.mxu0 0.0
    %1538 = vmatpush1.msra.mxu0 0.0
    %1539 = vmatprep.subr.mxu0 0.0
    %1540 = vmatpush1.msra.mxu0 0.0
    %1541 = vmatprep.subr.mxu0 0.0
    %1542 = vmatpush1.msra.mxu0 0.0
    %1543 = vmatprep.subr.mxu0 0.0
    %1544 = vmatpush1.msra.mxu0 0.0
    %1545 = vmatprep.subr.mxu0 0.0
    %1546 = vmatpush1.msra.mxu0 0.0
    %1547 = vmatprep.subr.mxu0 0.0
    %1548 = vmatpush1.msra.mxu0 0.0
    %1549 = vmatprep.subr.mxu0 0.0
    %1550 = vmatpush1.msra.mxu0 0.0
    %1551 = vmatprep.mubr.f32.mxu0 0.0
    %v1552 = vand.u32 %v349, 4294901760
    %1553 = vmatmul.mubr.f32.gmra.mrb[0].mxu0 %v1552
    %v1554 = vpop.f32.mrb[0].mxu0
    %v1555 = vadd.f32 %v1484, %v1554
    %v1556 = vpop.f32.mrb[0].mxu0
    %1557 = vdwg.mxu0
    %v1558 = vld [vmem:[#allocation2] sm:$0xff]
    %v1559 = vld [vmem:[#allocation2 + $0x8] sm:$0xff]
    %v1560 = vld [vmem:[#allocation2 + $0x10] sm:$0xff]
    %v1561 = vsub.f32 %v1009, %v1558
    %v1562 = vsub.f32 %v1011, %v1559
    %v1563 = vsub.f32 %v1555, %v1560
    %v1564 = vmul.f32 %v346, %v1561
    %v1565 = vmul.f32 %v347, %v1562
    %v1566 = vmul.f32 %v348, %v1563
    %v1567 = vmin.f32 %v1561, 0.0
    %v1568 = vmin.f32 %v1562, 0.0
    %v1569 = vmin.f32 %v1563, 0.0
    %v1570 = vsub.f32 %v1564, %v1567
    %v1571 = vsub.f32 %v1565, %v1568
    %v1572 = vsub.f32 %v1566, %v1569
    %v1573 = vadd.f32 %v1570, 0.0
    %v1574 = vadd.f32 %v1571, 0.0
    %v1575 = vadd.f32 %v1572, 0.0
    %1576 = vst [vmem:[#allocation7] sm:$0xff] %v1573
    %1577 = vst [vmem:[#allocation7 + $0x8] sm:$0xff] %v1574
    %1578 = vst [vmem:[#allocation7 + $0x10] sm:$0xff] %v1575
    // Predicated region
    $region18: #{tpu_custom_call.1} parent=1 // pred_check
      _
    $region19: #{tpu_custom_call.1} parent=1 // pred_check_branch
      %1580 = sbr.rel (0) target = $region21
    $region20: #{tpu_custom_call.1} parent=1 // pred_region
      %s1582 = ssub.s32 384, 384
      %1583 = vsyncadd [#allocation4], %s1582
      %s1585 = sshll.u32 [#allocation7], 4
      %s1586 = int_to_ptr.vmem [resolvable:$true] %s1585
      %1588 = dma.vmem_to_hbm [thread:$0]  %s1586, 384, %s2, [#allocation4]
    $region21: #{tpu_custom_call.1} parent=1 // pred_fallthru
      _
    // Predicated region
    $region22: #{tpu_custom_call.1} parent=1 // pred_check
      _
    $region23: #{tpu_custom_call.1} parent=1 // pred_check_branch
      %1590 = sbr.rel (0) target = $region25
    $region24: #{tpu_custom_call.1} parent=1 // pred_region
      %1591 = dma.done [#allocation4], 384
    $region25: #{tpu_custom_call.1} parent=1 // pred_fallthru
      _
    %1592 = vsyncpa [#allocation3], 1
    %1593 = vsyncpa [#allocation6], 1
    %1594 = vsyncpa [#allocation4], 1

</llo_original>
